<compile_context>
chip_gen: v6e
topology: v6e:2x2x1
jax: 0.10.0
libtpu: 0.0.40
codegen_flags: <defaults>
</compile_context>

<pallas_src>
import jax
import jax.numpy as jnp
import numpy as np
from jax.experimental import pallas as pl
from jax.experimental.pallas import tpu as pltpu


def _round_up(x, m):
    return ((x + m - 1) // m) * m


def _weight_cols(w, cp):
    """PyTorch conv weight [Co, Ci, K, K] -> [Co, K*K*cp].

    Column order is (ky, kx, ci) with Ci zero-padded to cp, matching the
    im2col row order built inside the kernel.
    """
    co, ci, kh, kw = w.shape
    wt = jnp.transpose(w, (0, 2, 3, 1))                      # (Co, ky, kx, Ci)
    wt = jnp.pad(wt, ((0, 0), (0, 0), (0, 0), (0, cp - ci)))
    return wt.reshape(co, kh * kw * cp)


def _make_kernel(W, K, Ch, CP, L, Lc, PADM):
    """Builds the fused ConvGRU kernel closed over static geometry."""
    p = K // 2
    Wp = W + 2 * p
    KK = K * K
    # Lane offset of tap (ky,kx) into the flattened padded image (conv #1).
    offs1 = [ky * Wp + kx for ky in range(K) for kx in range(K)]
    # Lane offset of tap (ky,kx) into the zero-margined h*reset image (conv #2).
    offs2 = [PADM + (ky - p) * Wp + (kx - p) for ky in range(K) for kx in range(K)]

    def kernel(xh_ref, h_ref, wbig_ref, woh_ref, b_ref, out_ref,
               col1_ref, col2_ref):
        # xh_ref : (CP, L)        bf16  flattened, zero-padded concat([x, h])
        # h_ref  : (Ch, Lc)       f32   prev state, output lane layout (junk lanes 0)
        # wbig_ref:(3*Ch, KK*CP)  bf16  [update | reset | out-gate-x (h cols 0)]
        # woh_ref: (Ch, KK*CP)    bf16  out-gate weights for the h*reset part
        # b_ref  : (3*Ch, 1)      f32   [b_update | b_reset | b_out]
        # out_ref: (Ch, Lc)       f32   new state, output lane layout
        # col1/col2: (KK*CP, Lc)  bf16  im2col VMEM scratch

        # ---- im2col #1: each tap window is a contiguous lane strip ----------
        for t in range(KK):
            d = offs1[t]
            col1_ref[t * CP:(t + 1) * CP, :] = xh_ref[:, d:d + Lc]

        # ---- conv #1: update | reset | out-gate-x, ONE MXU matmul -----------
        acc = jnp.dot(wbig_ref[...], col1_ref[...],
                      preferred_element_type=jnp.float32) + b_ref[...]  # (3Ch, Lc)

        update = jax.nn.sigmoid(acc[:Ch, :])
        reset = jax.nn.sigmoid(acc[Ch:2 * Ch, :])

        # ---- h*reset in the output layout; junk lanes are 0 because h is 0 --
        h = h_ref[...]                                       # (Ch, Lc) f32
        hr = h * reset                                       # padding lanes -> 0
        if CP > Ch:
            hr = jnp.concatenate(
                [hr, jnp.zeros((CP - Ch, Lc), jnp.float32)], axis=0)
        hr = hr.astype(jnp.bfloat16)                         # (CP, Lc), cast once
        zpad = jnp.zeros((CP, PADM), jnp.bfloat16)
        hr_full = jnp.concatenate([zpad, hr, zpad], axis=1)  # zero conv margins

        # ---- im2col #2 + conv #2: out-gate h*reset part, ONE MXU matmul -----
        for t in range(KK):
            d = offs2[t]
            col2_ref[t * CP:(t + 1) * CP, :] = hr_full[:, d:d + Lc]
        acc2 = acc[2 * Ch:, :] + jnp.dot(woh_ref[...], col2_ref[...],
                                         preferred_element_type=jnp.float32)
        out_inputs = jnp.tanh(acc2)

        # ---- blend in exact f32 ---------------------------------------------
        out_ref[...] = h * (1.0 - update) + out_inputs * update

    return kernel


# ------------------------------- glue (JAX) --------------------------------

def conv_gru_cell(x_nchw, prev_nchw, params):
    """Fused Pallas ConvGRUCell forward. Inputs/outputs are NCHW (PyTorch)."""
    w_u, b_u = params["update_w"], params["update_b"]
    w_r, b_r = params["reset_w"], params["reset_b"]
    w_o, b_o = params["out_w"], params["out_b"]

    Ch = w_u.shape[0]
    Cstk = w_u.shape[1]
    Cin = Cstk - Ch
    K = w_u.shape[2]
    p = K // 2
    B, _, H, W = x_nchw.shape
    Hp, Wp = H + 2 * p, W + 2 * p
    KK = K * K

    # Lane geometry: spatial flattened row-major over the PADDED width, so a
    # conv tap is a constant lane shift.  All lane extents are 128-multiples.
    Lc = _round_up(H * Wp, 128)                   # output lanes per step
    max_d = (K - 1) * Wp + (K - 1)                # largest tap offset
    L = _round_up(max_d + Lc, 128)                # flattened padded-image length
    PADM = _round_up(p * Wp + p, 128)             # zero margin for h*reset image
    CP = _round_up(Cstk, 16)                      # bf16 sublane-tile aligned channels

    if prev_nchw is None:  # TODO(synk): Python-level branch -> retrace per pattern
        prev_nchw = jnp.zeros((B, Ch, H, W), x_nchw.dtype)

    x = x_nchw.astype(jnp.float32)
    h = prev_nchw.astype(jnp.float32)

    # concat([x, h]) -> pad channels to CP -> pad spatially -> flatten -> pad
    # lanes to L -> cast to bf16 ONCE (halves HBM->VMEM DMA of the big input).
    xh = jnp.concatenate([x, h], axis=1)
    xh = jnp.pad(xh, ((0, 0), (0, CP - Cstk), (p, p), (p, p)))
    xh = xh.reshape(B, CP, Hp * Wp)
    xh = jnp.pad(xh, ((0, 0), (0, 0), (0, L - Hp * Wp))).astype(jnp.bfloat16)

    # prev state in the output lane layout (o = y*Wp + x); junk lanes are 0.
    h_in = jnp.pad(h, ((0, 0), (0, 0), (0, 0), (0, Wp - W))).reshape(B, Ch, H * Wp)
    h_in = jnp.pad(h_in, ((0, 0), (0, 0), (0, Lc - H * Wp)))

    # Fused conv#1 weights: [update | reset | out-gate-x (h columns zeroed)].
    w_ox = jnp.concatenate(
        [w_o[:, :Cin], jnp.zeros((Ch, Ch, K, K), w_o.dtype)], axis=1)
    w_big = jnp.concatenate(
        [_weight_cols(w_u, CP), _weight_cols(w_r, CP), _weight_cols(w_ox, CP)],
        axis=0).astype(jnp.bfloat16)              # (3Ch, KK*CP)
    w_oh = _weight_cols(w_o[:, Cin:], CP).astype(jnp.bfloat16)   # (Ch, KK*CP)
    b_big = jnp.concatenate([b_u, b_r, b_o])[:, None].astype(jnp.float32)

    kernel = _make_kernel(W, K, Ch, CP, L, Lc, PADM)

    out_flat = pl.pallas_call(
        kernel,
        out_shape=jax.ShapeDtypeStruct((B, Ch, Lc), jnp.float32),
        grid_spec=pltpu.PrefetchScalarGridSpec(
            num_scalar_prefetch=0,
            grid=(B,),
            in_specs=[
                # per-batch flattened padded image (batch dim squeezed)
                pl.BlockSpec((None, CP, L), lambda b: (b, 0, 0)),
                # per-batch prev state, output lane layout, f32 for exact blend
                pl.BlockSpec((None, Ch, Lc), lambda b: (b, 0, 0)),
                # weights / bias: constant index_map -> VMEM-resident
                pl.BlockSpec((3 * Ch, KK * CP), lambda b: (0, 0)),
                pl.BlockSpec((Ch, KK * CP), lambda b: (0, 0)),
                pl.BlockSpec((3 * Ch, 1), lambda b: (0, 0)),
            ],
            out_specs=pl.BlockSpec((None, Ch, Lc), lambda b: (b, 0, 0)),
            scratch_shapes=[
                pltpu.VMEM((KK * CP, Lc), jnp.bfloat16),   # im2col conv#1
                pltpu.VMEM((KK * CP, Lc), jnp.bfloat16),   # im2col conv#2
            ],
        ),
        compiler_params=pltpu.CompilerParams(
            dimension_semantics=("parallel",),      # >=2 steps -> both v7x TCs
            vmem_limit_bytes=32 * 1024 * 1024,      # per-step footprint ~0.4 MiB
        ),
    )(xh, h_in, w_big, w_oh, b_big)

    # (B, Ch, Lc) -> drop lane padding and per-row junk columns -> NCHW.
    out = out_flat[:, :, :H * Wp].reshape(B, Ch, H, Wp)[:, :, :, :W]
    return out


# ------------------------- pure-JAX reference check ------------------------

def _reference(x, h, params):
    """Mirrors the kernel arithmetic: bf16 matmul operands, f32 accumulation,
    f32 gate math / blending."""
    f32, bf16 = jnp.float32, jnp.bfloat16

    def conv(z, w, b):
        y = jax.lax.conv_general_dilated(
            z.astype(bf16), w.astype(bf16), window_strides=(1, 1),
            padding="SAME", dimension_numbers=("NCHW", "OIHW", "NCHW"),
            preferred_element_type=f32)
        return y + b.astype(f32)[None, :, None, None]

    x = x.astype(f32)
    h = h.astype(f32)
    stacked = jnp.concatenate([x, h], axis=1)
    update = jax.nn.sigmoid(conv(stacked, params["update_w"], params["update_b"]))
    reset = jax.nn.sigmoid(conv(stacked, params["reset_w"], params["reset_b"]))
    out_in = jnp.tanh(conv(jnp.concatenate([x, h * reset], axis=1),
                           params["out_w"], params["out_b"]))
    return h * (1.0 - update) + out_in * update


# ---------------------------------- main -----------------------------------

if __name__ == "__main__":
    B, Cin, Ch, H, W, K = 2, 4, 8, 16, 16, 3

    key = jax.random.PRNGKey(0)
    kx_, kh_, k1, k2, k3 = jax.random.split(key, 5)

    x = jax.random.normal(kx_, (B, Cin, H, W), dtype=jnp.float32)
    prev_state = jax.random.normal(kh_, (B, Ch, H, W), dtype=jnp.float32)

    # TODO(synk): orthogonal init from the PyTorch module not reproduced; plain
    # Gaussian init is used — forward-pass semantics are unaffected.
    wshape = (Ch, Cin + Ch, K, K)
    params = {
        "reset_w": 0.1 * jax.random.normal(k1, wshape, dtype=jnp.float32),
        "update_w": 0.1 * jax.random.normal(k2, wshape, dtype=jnp.float32),
        "out_w": 0.1 * jax.random.normal(k3, wshape, dtype=jnp.float32),
        "reset_b": jnp.zeros((Ch,), jnp.float32),
        "update_b": jnp.zeros((Ch,), jnp.float32),
        "out_b": jnp.zeros((Ch,), jnp.float32),
    }

    new_state = jax.jit(conv_gru_cell)(x, prev_state, params)
    new_state = jax.block_until_ready(new_state)

    ref = _reference(x, prev_state, params)
    # Tolerance reflects bf16 MXU operands (f32 accumulation) on both sides.
    np.testing.assert_allclose(np.asarray(new_state), np.asarray(ref),
                               rtol=1e-3, atol=1e-3)

    assert new_state.shape == (B, Ch, H, W)
    print("KERNEL_OK")
</pallas_src>

<mosaic_0001>
module attributes {stable_mosaic.version = 11 : i64} {
  func.func @kernel(%arg0: i32, %arg1: memref<1x16x512xbf16, #tpu.memory_space<vmem>>, %arg2: memref<1x8x384xf32, #tpu.memory_space<vmem>>, %arg3: memref<24x144xbf16, #tpu.memory_space<vmem>>, %arg4: memref<8x144xbf16, #tpu.memory_space<vmem>>, %arg5: memref<24x1xf32, #tpu.memory_space<vmem>>, %arg6: memref<1x8x384xf32, #tpu.memory_space<vmem>>, %arg7: memref<144x384xbf16, #tpu.memory_space<vmem>>, %arg8: memref<144x384xbf16, #tpu.memory_space<vmem>>) attributes {dimension_semantics = [#tpu.dimension_semantics<parallel>], iteration_bounds = array<i64: 2>, scalar_prefetch = 0 : i64, scratch_operands = 2 : i64, tpu.core_type = #tpu.core_type<tc>, window_params = [{transform_indices = @transform_0, window_bounds = array<i64: 1, 16, 512>}, {transform_indices = @transform_1, window_bounds = array<i64: 1, 8, 384>}, {pipeline_mode = #tpu.pipeline_mode<synchronous>, transform_indices = @transform_2, window_bounds = array<i64: 24, 144>}, {pipeline_mode = #tpu.pipeline_mode<synchronous>, transform_indices = @transform_3, window_bounds = array<i64: 8, 144>}, {pipeline_mode = #tpu.pipeline_mode<synchronous>, transform_indices = @transform_4, window_bounds = array<i64: 24, 1>}, {transform_indices = @transform_5, window_bounds = array<i64: 1, 8, 384>}]} {
    %c0 = arith.constant 0 : index
    %c0_0 = arith.constant 0 : index
    %c0_1 = arith.constant 0 : index
    %0 = vector.load %arg1[%c0, %c0_0, %c0_1] : memref<1x16x512xbf16, #tpu.memory_space<vmem>>, vector<1x16x384xbf16>
    %1 = vector.shape_cast %0 : vector<1x16x384xbf16> to vector<16x384xbf16>
    %c0_2 = arith.constant 0 : index
    %c0_3 = arith.constant 0 : index
    %2 = vector.load %arg7[%c0_2, %c0_3] : memref<144x384xbf16, #tpu.memory_space<vmem>>, vector<16x384xbf16>
    tpu.vector_store %arg7[%c0_2, %c0_3], %1 {strides = array<i32>} : memref<144x384xbf16, #tpu.memory_space<vmem>>, vector<16x384xbf16>,
    %c0_4 = arith.constant 0 : index
    %c0_5 = arith.constant 0 : index
    %c1 = arith.constant 1 : index
    %3 = vector.load %arg1[%c0_4, %c0_5, %c1] : memref<1x16x512xbf16, #tpu.memory_space<vmem>>, vector<1x16x384xbf16>
    %4 = vector.shape_cast %3 : vector<1x16x384xbf16> to vector<16x384xbf16>
    %c16 = arith.constant 16 : index
    %c0_6 = arith.constant 0 : index
    %5 = vector.load %arg7[%c16, %c0_6] : memref<144x384xbf16, #tpu.memory_space<vmem>>, vector<16x384xbf16>
    tpu.vector_store %arg7[%c16, %c0_6], %4 {strides = array<i32>} : memref<144x384xbf16, #tpu.memory_space<vmem>>, vector<16x384xbf16>,
    %c0_7 = arith.constant 0 : index
    %c0_8 = arith.constant 0 : index
    %c2 = arith.constant 2 : index
    %6 = vector.load %arg1[%c0_7, %c0_8, %c2] : memref<1x16x512xbf16, #tpu.memory_space<vmem>>, vector<1x16x384xbf16>
    %7 = vector.shape_cast %6 : vector<1x16x384xbf16> to vector<16x384xbf16>
    %c32 = arith.constant 32 : index
    %c0_9 = arith.constant 0 : index
    %8 = vector.load %arg7[%c32, %c0_9] : memref<144x384xbf16, #tpu.memory_space<vmem>>, vector<16x384xbf16>
    tpu.vector_store %arg7[%c32, %c0_9], %7 {strides = array<i32>} : memref<144x384xbf16, #tpu.memory_space<vmem>>, vector<16x384xbf16>,
    %c0_10 = arith.constant 0 : index
    %c0_11 = arith.constant 0 : index
    %c18 = arith.constant 18 : index
    %9 = vector.load %arg1[%c0_10, %c0_11, %c18] : memref<1x16x512xbf16, #tpu.memory_space<vmem>>, vector<1x16x384xbf16>
    %10 = vector.shape_cast %9 : vector<1x16x384xbf16> to vector<16x384xbf16>
    %c48 = arith.constant 48 : index
    %c0_12 = arith.constant 0 : index
    %11 = vector.load %arg7[%c48, %c0_12] : memref<144x384xbf16, #tpu.memory_space<vmem>>, vector<16x384xbf16>
    tpu.vector_store %arg7[%c48, %c0_12], %10 {strides = array<i32>} : memref<144x384xbf16, #tpu.memory_space<vmem>>, vector<16x384xbf16>,
    %c0_13 = arith.constant 0 : index
    %c0_14 = arith.constant 0 : index
    %c19 = arith.constant 19 : index
    %12 = vector.load %arg1[%c0_13, %c0_14, %c19] : memref<1x16x512xbf16, #tpu.memory_space<vmem>>, vector<1x16x384xbf16>
    %13 = vector.shape_cast %12 : vector<1x16x384xbf16> to vector<16x384xbf16>
    %c64 = arith.constant 64 : index
    %c0_15 = arith.constant 0 : index
    %14 = vector.load %arg7[%c64, %c0_15] : memref<144x384xbf16, #tpu.memory_space<vmem>>, vector<16x384xbf16>
    tpu.vector_store %arg7[%c64, %c0_15], %13 {strides = array<i32>} : memref<144x384xbf16, #tpu.memory_space<vmem>>, vector<16x384xbf16>,
    %c0_16 = arith.constant 0 : index
    %c0_17 = arith.constant 0 : index
    %c20 = arith.constant 20 : index
    %15 = vector.load %arg1[%c0_16, %c0_17, %c20] : memref<1x16x512xbf16, #tpu.memory_space<vmem>>, vector<1x16x384xbf16>
    %16 = vector.shape_cast %15 : vector<1x16x384xbf16> to vector<16x384xbf16>
    %c80 = arith.constant 80 : index
    %c0_18 = arith.constant 0 : index
    %17 = vector.load %arg7[%c80, %c0_18] : memref<144x384xbf16, #tpu.memory_space<vmem>>, vector<16x384xbf16>
    tpu.vector_store %arg7[%c80, %c0_18], %16 {strides = array<i32>} : memref<144x384xbf16, #tpu.memory_space<vmem>>, vector<16x384xbf16>,
    %c0_19 = arith.constant 0 : index
    %c0_20 = arith.constant 0 : index
    %c36 = arith.constant 36 : index
    %18 = vector.load %arg1[%c0_19, %c0_20, %c36] : memref<1x16x512xbf16, #tpu.memory_space<vmem>>, vector<1x16x384xbf16>
    %19 = vector.shape_cast %18 : vector<1x16x384xbf16> to vector<16x384xbf16>
    %c96 = arith.constant 96 : index
    %c0_21 = arith.constant 0 : index
    %20 = vector.load %arg7[%c96, %c0_21] : memref<144x384xbf16, #tpu.memory_space<vmem>>, vector<16x384xbf16>
    tpu.vector_store %arg7[%c96, %c0_21], %19 {strides = array<i32>} : memref<144x384xbf16, #tpu.memory_space<vmem>>, vector<16x384xbf16>,
    %c0_22 = arith.constant 0 : index
    %c0_23 = arith.constant 0 : index
    %c37 = arith.constant 37 : index
    %21 = vector.load %arg1[%c0_22, %c0_23, %c37] : memref<1x16x512xbf16, #tpu.memory_space<vmem>>, vector<1x16x384xbf16>
    %22 = vector.shape_cast %21 : vector<1x16x384xbf16> to vector<16x384xbf16>
    %c112 = arith.constant 112 : index
    %c0_24 = arith.constant 0 : index
    %23 = vector.load %arg7[%c112, %c0_24] : memref<144x384xbf16, #tpu.memory_space<vmem>>, vector<16x384xbf16>
    tpu.vector_store %arg7[%c112, %c0_24], %22 {strides = array<i32>} : memref<144x384xbf16, #tpu.memory_space<vmem>>, vector<16x384xbf16>,
    %c0_25 = arith.constant 0 : index
    %c0_26 = arith.constant 0 : index
    %c38 = arith.constant 38 : index
    %24 = vector.load %arg1[%c0_25, %c0_26, %c38] : memref<1x16x512xbf16, #tpu.memory_space<vmem>>, vector<1x16x384xbf16>
    %25 = vector.shape_cast %24 : vector<1x16x384xbf16> to vector<16x384xbf16>
    %c128 = arith.constant 128 : index
    %c0_27 = arith.constant 0 : index
    %26 = vector.load %arg7[%c128, %c0_27] : memref<144x384xbf16, #tpu.memory_space<vmem>>, vector<16x384xbf16>
    tpu.vector_store %arg7[%c128, %c0_27], %25 {strides = array<i32>} : memref<144x384xbf16, #tpu.memory_space<vmem>>, vector<16x384xbf16>,
    %c0_28 = arith.constant 0 : index
    %c0_29 = arith.constant 0 : index
    %27 = vector.load %arg3[%c0_28, %c0_29] : memref<24x144xbf16, #tpu.memory_space<vmem>>, vector<24x144xbf16>
    %c0_30 = arith.constant 0 : index
    %c0_31 = arith.constant 0 : index
    %28 = vector.load %arg7[%c0_30, %c0_31] : memref<144x384xbf16, #tpu.memory_space<vmem>>, vector<144x384xbf16>
    %cst = arith.constant dense<0.000000e+00> : vector<24x384xf32>
    %29 = tpu.matmul %27, %28, %cst {dimension_numbers = #tpu.dot_dimension_numbers<[1], [0], [0], [1], [0, 0, 1, 1], [], []>} : vector<24x144xbf16>, vector<144x384xbf16>, vector<24x384xf32> -> vector<24x384xf32>
    %c0_32 = arith.constant 0 : index
    %c0_33 = arith.constant 0 : index
    %30 = vector.load %arg5[%c0_32, %c0_33] : memref<24x1xf32, #tpu.memory_space<vmem>>, vector<24x1xf32>
    %31 = vector.broadcast %30 : vector<24x1xf32> to vector<24x384xf32>
    %32 = arith.addf %29, %31 : vector<24x384xf32>
    %33 = vector.extract_strided_slice %32 {offsets = [0, 0], sizes = [8, 384], strides = [1, 1]} : vector<24x384xf32> to vector<8x384xf32>
    %34 = arith.negf %33 : vector<8x384xf32>
    %35 = math.exp %34 : vector<8x384xf32>
    %cst_34 = arith.constant 1.000000e+00 : f32
    %36 = vector.broadcast %cst_34 : f32 to vector<8x384xf32>
    %37 = arith.addf %36, %35 : vector<8x384xf32>
    %38 = arith.divf %36, %37 : vector<8x384xf32>
    %39 = vector.extract_strided_slice %32 {offsets = [8, 0], sizes = [8, 384], strides = [1, 1]} : vector<24x384xf32> to vector<8x384xf32>
    %40 = arith.negf %39 : vector<8x384xf32>
    %41 = math.exp %40 : vector<8x384xf32>
    %cst_35 = arith.constant 1.000000e+00 : f32
    %42 = vector.broadcast %cst_35 : f32 to vector<8x384xf32>
    %43 = arith.addf %42, %41 : vector<8x384xf32>
    %44 = arith.divf %42, %43 : vector<8x384xf32>
    %c0_36 = arith.constant 0 : index
    %c0_37 = arith.constant 0 : index
    %c0_38 = arith.constant 0 : index
    %45 = vector.load %arg2[%c0_36, %c0_37, %c0_38] : memref<1x8x384xf32, #tpu.memory_space<vmem>>, vector<1x8x384xf32>
    %46 = vector.shape_cast %45 : vector<1x8x384xf32> to vector<8x384xf32>
    %47 = arith.mulf %46, %44 : vector<8x384xf32>
    %cst_39 = arith.constant 0.000000e+00 : f32
    %48 = vector.broadcast %cst_39 : f32 to vector<8x384xf32>
    %49 = tpu.concatenate %47, %48 in 0 : vector<8x384xf32>, vector<8x384xf32> -> vector<16x384xf32>
    %50 = arith.truncf %49 : vector<16x384xf32> to vector<16x384xbf16>
    %cst_40 = arith.constant 0.000000e+00 : bf16
    %51 = vector.broadcast %cst_40 : bf16 to vector<16x128xbf16>
    %52 = tpu.concatenate %51, %50, %51 in 1 : vector<16x128xbf16>, vector<16x384xbf16>, vector<16x128xbf16> -> vector<16x640xbf16>
    %53 = vector.extract_strided_slice %52 {offsets = [0, 109], sizes = [16, 384], strides = [1, 1]} : vector<16x640xbf16> to vector<16x384xbf16>
    %c0_41 = arith.constant 0 : index
    %c0_42 = arith.constant 0 : index
    %54 = vector.load %arg8[%c0_41, %c0_42] : memref<144x384xbf16, #tpu.memory_space<vmem>>, vector<16x384xbf16>
    tpu.vector_store %arg8[%c0_41, %c0_42], %53 {strides = array<i32>} : memref<144x384xbf16, #tpu.memory_space<vmem>>, vector<16x384xbf16>,
    %55 = vector.extract_strided_slice %52 {offsets = [0, 110], sizes = [16, 384], strides = [1, 1]} : vector<16x640xbf16> to vector<16x384xbf16>
    %c16_43 = arith.constant 16 : index
    %c0_44 = arith.constant 0 : index
    %56 = vector.load %arg8[%c16_43, %c0_44] : memref<144x384xbf16, #tpu.memory_space<vmem>>, vector<16x384xbf16>
    tpu.vector_store %arg8[%c16_43, %c0_44], %55 {strides = array<i32>} : memref<144x384xbf16, #tpu.memory_space<vmem>>, vector<16x384xbf16>,
    %57 = vector.extract_strided_slice %52 {offsets = [0, 111], sizes = [16, 384], strides = [1, 1]} : vector<16x640xbf16> to vector<16x384xbf16>
    %c32_45 = arith.constant 32 : index
    %c0_46 = arith.constant 0 : index
    %58 = vector.load %arg8[%c32_45, %c0_46] : memref<144x384xbf16, #tpu.memory_space<vmem>>, vector<16x384xbf16>
    tpu.vector_store %arg8[%c32_45, %c0_46], %57 {strides = array<i32>} : memref<144x384xbf16, #tpu.memory_space<vmem>>, vector<16x384xbf16>,
    %59 = vector.extract_strided_slice %52 {offsets = [0, 127], sizes = [16, 384], strides = [1, 1]} : vector<16x640xbf16> to vector<16x384xbf16>
    %c48_47 = arith.constant 48 : index
    %c0_48 = arith.constant 0 : index
    %60 = vector.load %arg8[%c48_47, %c0_48] : memref<144x384xbf16, #tpu.memory_space<vmem>>, vector<16x384xbf16>
    tpu.vector_store %arg8[%c48_47, %c0_48], %59 {strides = array<i32>} : memref<144x384xbf16, #tpu.memory_space<vmem>>, vector<16x384xbf16>,
    %61 = vector.extract_strided_slice %52 {offsets = [0, 128], sizes = [16, 384], strides = [1, 1]} : vector<16x640xbf16> to vector<16x384xbf16>
    %c64_49 = arith.constant 64 : index
    %c0_50 = arith.constant 0 : index
    %62 = vector.load %arg8[%c64_49, %c0_50] : memref<144x384xbf16, #tpu.memory_space<vmem>>, vector<16x384xbf16>
    tpu.vector_store %arg8[%c64_49, %c0_50], %61 {strides = array<i32>} : memref<144x384xbf16, #tpu.memory_space<vmem>>, vector<16x384xbf16>,
    %63 = vector.extract_strided_slice %52 {offsets = [0, 129], sizes = [16, 384], strides = [1, 1]} : vector<16x640xbf16> to vector<16x384xbf16>
    %c80_51 = arith.constant 80 : index
    %c0_52 = arith.constant 0 : index
    %64 = vector.load %arg8[%c80_51, %c0_52] : memref<144x384xbf16, #tpu.memory_space<vmem>>, vector<16x384xbf16>
    tpu.vector_store %arg8[%c80_51, %c0_52], %63 {strides = array<i32>} : memref<144x384xbf16, #tpu.memory_space<vmem>>, vector<16x384xbf16>,
    %65 = vector.extract_strided_slice %52 {offsets = [0, 145], sizes = [16, 384], strides = [1, 1]} : vector<16x640xbf16> to vector<16x384xbf16>
    %c96_53 = arith.constant 96 : index
    %c0_54 = arith.constant 0 : index
    %66 = vector.load %arg8[%c96_53, %c0_54] : memref<144x384xbf16, #tpu.memory_space<vmem>>, vector<16x384xbf16>
    tpu.vector_store %arg8[%c96_53, %c0_54], %65 {strides = array<i32>} : memref<144x384xbf16, #tpu.memory_space<vmem>>, vector<16x384xbf16>,
    %67 = vector.extract_strided_slice %52 {offsets = [0, 146], sizes = [16, 384], strides = [1, 1]} : vector<16x640xbf16> to vector<16x384xbf16>
    %c112_55 = arith.constant 112 : index
    %c0_56 = arith.constant 0 : index
    %68 = vector.load %arg8[%c112_55, %c0_56] : memref<144x384xbf16, #tpu.memory_space<vmem>>, vector<16x384xbf16>
    tpu.vector_store %arg8[%c112_55, %c0_56], %67 {strides = array<i32>} : memref<144x384xbf16, #tpu.memory_space<vmem>>, vector<16x384xbf16>,
    %69 = vector.extract_strided_slice %52 {offsets = [0, 147], sizes = [16, 384], strides = [1, 1]} : vector<16x640xbf16> to vector<16x384xbf16>
    %c128_57 = arith.constant 128 : index
    %c0_58 = arith.constant 0 : index
    %70 = vector.load %arg8[%c128_57, %c0_58] : memref<144x384xbf16, #tpu.memory_space<vmem>>, vector<16x384xbf16>
    tpu.vector_store %arg8[%c128_57, %c0_58], %69 {strides = array<i32>} : memref<144x384xbf16, #tpu.memory_space<vmem>>, vector<16x384xbf16>,
    %71 = vector.extract_strided_slice %32 {offsets = [16, 0], sizes = [8, 384], strides = [1, 1]} : vector<24x384xf32> to vector<8x384xf32>
    %c0_59 = arith.constant 0 : index
    %c0_60 = arith.constant 0 : index
    %72 = vector.load %arg4[%c0_59, %c0_60] : memref<8x144xbf16, #tpu.memory_space<vmem>>, vector<8x144xbf16>
    %c0_61 = arith.constant 0 : index
    %c0_62 = arith.constant 0 : index
    %73 = vector.load %arg8[%c0_61, %c0_62] : memref<144x384xbf16, #tpu.memory_space<vmem>>, vector<144x384xbf16>
    %cst_63 = arith.constant dense<0.000000e+00> : vector<8x384xf32>
    %74 = tpu.matmul %72, %73, %cst_63 {dimension_numbers = #tpu.dot_dimension_numbers<[1], [0], [0], [1], [0, 0, 1, 1], [], []>} : vector<8x144xbf16>, vector<144x384xbf16>, vector<8x384xf32> -> vector<8x384xf32>
    %75 = arith.addf %71, %74 : vector<8x384xf32>
    %76 = math.tanh %75 : vector<8x384xf32>
    %cst_64 = arith.constant 1.000000e+00 : f32
    %77 = vector.broadcast %cst_64 : f32 to vector<8x384xf32>
    %78 = arith.subf %77, %38 : vector<8x384xf32>
    %79 = arith.mulf %46, %78 : vector<8x384xf32>
    %80 = arith.mulf %76, %38 : vector<8x384xf32>
    %81 = arith.addf %79, %80 : vector<8x384xf32>
    %c0_65 = arith.constant 0 : index
    %c0_66 = arith.constant 0 : index
    %c0_67 = arith.constant 0 : index
    %82 = vector.load %arg6[%c0_65, %c0_66, %c0_67] : memref<1x8x384xf32, #tpu.memory_space<vmem>>, vector<1x8x384xf32>
    %83 = vector.shape_cast %82 : vector<1x8x384xf32> to vector<8x384xf32>
    %84 = vector.shape_cast %81 : vector<8x384xf32> to vector<1x8x384xf32>
    tpu.vector_store %arg6[%c0_65, %c0_66, %c0_67], %84 {strides = array<i32>} : memref<1x8x384xf32, #tpu.memory_space<vmem>>, vector<1x8x384xf32>,
    return
  }
  func.func @transform_0(%arg0: i32) -> (i32, i32, i32) {
    %c0_i32 = arith.constant 0 : i32
    %c0_i32_0 = arith.constant 0 : i32
    %c0_i32_1 = arith.constant 0 : i32
    return %arg0, %c0_i32, %c0_i32_0 : i32, i32, i32
  }
  func.func @transform_1(%arg0: i32) -> (i32, i32, i32) {
    %c0_i32 = arith.constant 0 : i32
    %c0_i32_0 = arith.constant 0 : i32
    %c0_i32_1 = arith.constant 0 : i32
    return %arg0, %c0_i32, %c0_i32_0 : i32, i32, i32
  }
  func.func @transform_2(%arg0: i32) -> (i32, i32) {
    %c0_i32 = arith.constant 0 : i32
    %c0_i32_0 = arith.constant 0 : i32
    %c0_i32_1 = arith.constant 0 : i32
    return %c0_i32, %c0_i32_0 : i32, i32
  }
  func.func @transform_3(%arg0: i32) -> (i32, i32) {
    %c0_i32 = arith.constant 0 : i32
    %c0_i32_0 = arith.constant 0 : i32
    %c0_i32_1 = arith.constant 0 : i32
    return %c0_i32, %c0_i32_0 : i32, i32
  }
  func.func @transform_4(%arg0: i32) -> (i32, i32) {
    %c0_i32 = arith.constant 0 : i32
    %c0_i32_0 = arith.constant 0 : i32
    %c0_i32_1 = arith.constant 0 : i32
    return %c0_i32, %c0_i32_0 : i32, i32
  }
  func.func @transform_5(%arg0: i32) -> (i32, i32, i32) {
    %c0_i32 = arith.constant 0 : i32
    %c0_i32_0 = arith.constant 0 : i32
    %c0_i32_1 = arith.constant 0 : i32
    return %arg0, %c0_i32, %c0_i32_0 : i32, i32, i32
  }
}

</mosaic_0001>

<llo_original>
// kernel: conv_gru_cell.1
$region0: #{conv_gru_cell.1}
  #allocation0 [shape = 'u32[]', space=smem, size = 0x4, offset = 0x4, fixed_abs, tag = 'smem constant byte address 0x4 - core index']
  #allocation1 [shape = 'u32[144,128]{1,0:T(1,128)}', space=vmem, size = 0x12000, scoped, tag = 'internal scratch']
  #allocation2 [shape = 'bf16[144,384]{1,0:T(8,128)(2,1)}', space=vmem, size = 0x1b000, scoped, tag = 'scratch operand']
  #allocation3 [shape = 'bf16[144,384]{1,0:T(8,128)(2,1)}', space=vmem, size = 0x1b000, scoped, tag = 'scratch operand']
  %s0 = inlined_call_operand.vmem [shape: bf16[2,16,512], index: 0, kind: input, shape index: {}]
  %s1 = inlined_call_operand.vmem [shape: f32[2,8,384], index: 1, kind: input, shape index: {}]
  %s2 = inlined_call_operand.vmem [shape: bf16[24,144], index: 2, kind: input, shape index: {}]
  %s3 = inlined_call_operand.vmem [shape: bf16[8,144], index: 3, kind: input, shape index: {}]
  %s4 = inlined_call_operand.vmem [shape: f32[24,1], index: 4, kind: input, shape index: {}]
  %s5 = inlined_call_operand.vmem [shape: f32[2,8,384], index: 5, kind: output, shape index: {}]
  %s6 = sld [smem:[#allocation0]]
  $region53: #{conv_gru_cell.1} parent=0
    _
  %s8 = ssub.s32 1, %s6
  %s9 = scalar_select 0, %s8, %s6
  loop: start=0, step=1, limit=4
  $region2: #{conv_gru_cell.1} parent=0 // loop_pre_header
    _
  $region3: #{conv_gru_cell.1} parent=0 // loop_header
    %s11 = sphi 0, %s15
    %p12 = scmp.ge.s32.totalorder %s11, 4
    %s21 = sphi 0, %s23
    %s24 = sphi 0, %s21
    %s25 = sphi 0, %s24
    %s41 = sphi 0, %s25
    %s47 = sphi 0, %s49
    %s50 = sphi 0, %s47
    %s51 = sphi 0, %s50
    %s67 = sphi 0, %s51
    %s71 = sphi 0, %s71
    %s73 = sphi 0, %s71
    %s74 = sphi 0, %s73
    %s88 = sphi 0, %s74
    %s92 = sphi 0, %s92
    %s94 = sphi 0, %s92
    %s95 = sphi 0, %s94
    %s109 = sphi 0, %s95
    %s113 = sphi 0, %s113
    %s115 = sphi 0, %s113
    %s116 = sphi 0, %s115
    %s130 = sphi 0, %s116
    %s136 = sphi 0, %s138
    %s139 = sphi 0, %s136
    %s140 = sphi 0, %s139
    %s156 = sphi 0, %s140
  $region4: #{conv_gru_cell.1} parent=0 // loop_header_branch
    %14 = sbr.rel (%p12) target = $region8
  $region5: #{conv_gru_cell.1} parent=0 // loop_body
    %s16 = ssub.s32 %s11, 1
    %s17 = ssub.s32 %s11, 2
    %s18 = sadd.s32 %s11, 1
    %s19 = ssub.s32 %s11, %s18
    %p20 = scmp.eq.s32.totalorder %s19, 0
    %s22 = sadd.s32 %s21, 1
    %s23 = scalar_select %p20, %s21, %s22
    %p26 = pneg %p20
    %p27 = scmp.eq.s32.totalorder %s11, 1
    %p28 = por %p26, %p27
    %p29 = scmp.ne.s32.totalorder %s21, %s24
    %p30 = scmp.eq.s32.totalorder %s11, 0
    %p31 = por %p29, %p30
    %p32 = scmp.ne.s32.totalorder %s21, %s24
    %p33 = scmp.eq.s32.totalorder %s16, 1
    %p34 = por %p32, %p33
    %p35 = scmp.ne.s32.totalorder %s24, %s25
    %p36 = scmp.eq.s32.totalorder %s16, 0
    %p37 = por %p35, %p36
    %p38 = scmp.ne.s32.totalorder %s24, %s25
    %p39 = scmp.eq.s32.totalorder %s17, 1
    %p40 = por %p38, %p39
    %p42 = scmp.ne.s32.totalorder %s25, %s41
    %p43 = scmp.eq.s32.totalorder %s17, 0
    %p44 = por %p42, %p43
    %s45 = ssub.s32 %s11, %s18
    %p46 = scmp.eq.s32.totalorder %s45, 0
    %s48 = sadd.s32 %s47, 1
    %s49 = scalar_select %p46, %s47, %s48
    %p52 = pneg %p46
    %p53 = scmp.eq.s32.totalorder %s11, 1
    %p54 = por %p52, %p53
    %p55 = scmp.ne.s32.totalorder %s47, %s50
    %p56 = scmp.eq.s32.totalorder %s11, 0
    %p57 = por %p55, %p56
    %p58 = scmp.ne.s32.totalorder %s47, %s50
    %p59 = scmp.eq.s32.totalorder %s16, 1
    %p60 = por %p58, %p59
    %p61 = scmp.ne.s32.totalorder %s50, %s51
    %p62 = scmp.eq.s32.totalorder %s16, 0
    %p63 = por %p61, %p62
    %p64 = scmp.ne.s32.totalorder %s50, %s51
    %p65 = scmp.eq.s32.totalorder %s17, 1
    %p66 = por %p64, %p65
    %p68 = scmp.ne.s32.totalorder %s51, %s67
    %p69 = scmp.eq.s32.totalorder %s17, 0
    %p70 = por %p68, %p69
    %s72 = sadd.s32 %s71, 1
    %p75 = scmp.eq.s32.totalorder %s11, 1
    %p76 = scmp.ne.s32.totalorder %s71, %s73
    %p77 = scmp.eq.s32.totalorder %s11, 0
    %p78 = por %p76, %p77
    %p79 = scmp.ne.s32.totalorder %s71, %s73
    %p80 = scmp.eq.s32.totalorder %s16, 1
    %p81 = por %p79, %p80
    %p82 = scmp.ne.s32.totalorder %s73, %s74
    %p83 = scmp.eq.s32.totalorder %s16, 0
    %p84 = por %p82, %p83
    %p85 = scmp.ne.s32.totalorder %s73, %s74
    %p86 = scmp.eq.s32.totalorder %s17, 1
    %p87 = por %p85, %p86
    %p89 = scmp.ne.s32.totalorder %s74, %s88
    %p90 = scmp.eq.s32.totalorder %s17, 0
    %p91 = por %p89, %p90
    %s93 = sadd.s32 %s92, 1
    %p96 = scmp.eq.s32.totalorder %s11, 1
    %p97 = scmp.ne.s32.totalorder %s92, %s94
    %p98 = scmp.eq.s32.totalorder %s11, 0
    %p99 = por %p97, %p98
    %p100 = scmp.ne.s32.totalorder %s92, %s94
    %p101 = scmp.eq.s32.totalorder %s16, 1
    %p102 = por %p100, %p101
    %p103 = scmp.ne.s32.totalorder %s94, %s95
    %p104 = scmp.eq.s32.totalorder %s16, 0
    %p105 = por %p103, %p104
    %p106 = scmp.ne.s32.totalorder %s94, %s95
    %p107 = scmp.eq.s32.totalorder %s17, 1
    %p108 = por %p106, %p107
    %p110 = scmp.ne.s32.totalorder %s95, %s109
    %p111 = scmp.eq.s32.totalorder %s17, 0
    %p112 = por %p110, %p111
    %s114 = sadd.s32 %s113, 1
    %p117 = scmp.eq.s32.totalorder %s11, 1
    %p118 = scmp.ne.s32.totalorder %s113, %s115
    %p119 = scmp.eq.s32.totalorder %s11, 0
    %p120 = por %p118, %p119
    %p121 = scmp.ne.s32.totalorder %s113, %s115
    %p122 = scmp.eq.s32.totalorder %s16, 1
    %p123 = por %p121, %p122
    %p124 = scmp.ne.s32.totalorder %s115, %s116
    %p125 = scmp.eq.s32.totalorder %s16, 0
    %p126 = por %p124, %p125
    %p127 = scmp.ne.s32.totalorder %s115, %s116
    %p128 = scmp.eq.s32.totalorder %s17, 1
    %p129 = por %p127, %p128
    %p131 = scmp.ne.s32.totalorder %s116, %s130
    %p132 = scmp.eq.s32.totalorder %s17, 0
    %p133 = por %p131, %p132
    %s134 = ssub.s32 %s11, %s18
    %p135 = scmp.eq.s32.totalorder %s134, 0
    %s137 = sadd.s32 %s136, 1
    %s138 = scalar_select %p135, %s136, %s137
    %p141 = pneg %p135
    %p142 = scmp.eq.s32.totalorder %s11, 1
    %p143 = por %p141, %p142
    %p144 = scmp.ne.s32.totalorder %s136, %s139
    %p145 = scmp.eq.s32.totalorder %s11, 0
    %p146 = por %p144, %p145
    %p147 = scmp.ne.s32.totalorder %s136, %s139
    %p148 = scmp.eq.s32.totalorder %s16, 1
    %p149 = por %p147, %p148
    %p150 = scmp.ne.s32.totalorder %s139, %s140
    %p151 = scmp.eq.s32.totalorder %s16, 0
    %p152 = por %p150, %p151
    %p153 = scmp.ne.s32.totalorder %s139, %s140
    %p154 = scmp.eq.s32.totalorder %s17, 1
    %p155 = por %p153, %p154
    %p157 = scmp.ne.s32.totalorder %s140, %s156
    %p158 = scmp.eq.s32.totalorder %s17, 0
    %p159 = por %p157, %p158
    %p160 = scmp.le.s32.totalorder 1, %s11
    %p161 = scmp.lt.s32.totalorder %s11, 3
    %p162 = pnand %p160, %p161
    %p163 = pneg %p162
    // Predicated region
    $region9: #{conv_gru_cell.1} parent=5 // pred_check
      _
    $region10: #{conv_gru_cell.1} parent=5 // pred_check_branch
      %165 = sbr.rel (%p162) target = $region12
    $region11: #{conv_gru_cell.1} parent=5 // pred_region
      %s166 = ssub.s32 %s11, 1
      // Predicated region
      $region13: #{conv_gru_cell.1} parent=11 // pred_check
        %p167 = pneg %p84
      $region14: #{conv_gru_cell.1} parent=11 // pred_check_branch
        %169 = sbr.rel (%p167) target = $region16
      $region15: #{conv_gru_cell.1} parent=11 // pred_region
        _
      $region16: #{conv_gru_cell.1} parent=11 // pred_fallthru
        _
      // Predicated region
      $region17: #{conv_gru_cell.1} parent=11 // pred_check
        %p170 = pneg %p105
      $region18: #{conv_gru_cell.1} parent=11 // pred_check_branch
        %172 = sbr.rel (%p170) target = $region20
      $region19: #{conv_gru_cell.1} parent=11 // pred_region
        _
      $region20: #{conv_gru_cell.1} parent=11 // pred_fallthru
        _
      // Predicated region
      $region21: #{conv_gru_cell.1} parent=11 // pred_check
        %p173 = pneg %p126
      $region22: #{conv_gru_cell.1} parent=11 // pred_check_branch
        %175 = sbr.rel (%p173) target = $region24
      $region23: #{conv_gru_cell.1} parent=11 // pred_region
        _
      $region24: #{conv_gru_cell.1} parent=11 // pred_fallthru
        _
    $region12: #{conv_gru_cell.1} parent=5 // pred_fallthru
      _
    %p176 = scmp.lt.s32.totalorder %s11, 2
    // Predicated region
    $region25: #{conv_gru_cell.1} parent=5 // pred_check
      %p177 = pneg %p176
    $region26: #{conv_gru_cell.1} parent=5 // pred_check_branch
      %179 = sbr.rel (%p177) target = $region28
    $region27: #{conv_gru_cell.1} parent=5 // pred_region
      // Predicated region
      $region29: #{conv_gru_cell.1} parent=27 // pred_check
        %p180 = pneg %p31
      $region30: #{conv_gru_cell.1} parent=27 // pred_check_branch
        %182 = sbr.rel (%p180) target = $region32
      $region31: #{conv_gru_cell.1} parent=27 // pred_region
        %p183 = scmp.lt.s32.totalorder %s11, 1
        %s184 = scalar_select %p183, %s11, 1
        %s185 = smul.addr %s184, 8
        %s186 = smul.addr %s185, 4
        %s187 = scalar_lea.vmem %s0, %s186
      $region32: #{conv_gru_cell.1} parent=27 // pred_fallthru
        _
      // Predicated region
      $region33: #{conv_gru_cell.1} parent=27 // pred_check
        %p188 = pneg %p57
      $region34: #{conv_gru_cell.1} parent=27 // pred_check_branch
        %190 = sbr.rel (%p188) target = $region36
      $region35: #{conv_gru_cell.1} parent=27 // pred_region
        %p191 = scmp.lt.s32.totalorder %s11, 1
        %s192 = scalar_select %p191, %s11, 1
        %s193 = smul.addr %s192, 3
        %s194 = smul.addr %s193, 8
        %s195 = scalar_lea.vmem %s1, %s194
      $region36: #{conv_gru_cell.1} parent=27 // pred_fallthru
        _
    $region28: #{conv_gru_cell.1} parent=5 // pred_fallthru
      _
    %p196 = scmp.le.s32.totalorder 1, %s11
    %p197 = scmp.lt.s32.totalorder %s11, 3
    %p198 = pnand %p196, %p197
    %p199 = pneg %p198
    // Predicated region
    $region37: #{conv_gru_cell.1} parent=5 // pred_check
      _
    $region38: #{conv_gru_cell.1} parent=5 // pred_check_branch
      %201 = sbr.rel (%p198) target = $region40
    $region39: #{conv_gru_cell.1} parent=5 // pred_region
      %s202 = ssub.s32 %s11, 1
      %p203 = scmp.lt.s32.totalorder %s16, 1
      %s204 = scalar_select %p203, %s16, 1
      %s205 = smul.addr %s204, 8
      %s206 = smul.addr %s205, 4
      %s207 = scalar_lea.vmem %s0, %s206
      %p208 = pneg %p37
      %p209 = pneg %p34
      %p210 = scmp.lt.s32.totalorder %s16, 1
      %s211 = scalar_select %p210, %s16, 1
      %s212 = smul.addr %s211, 3
      %s213 = smul.addr %s212, 8
      %s214 = scalar_lea.vmem %s1, %s213
      %p215 = pneg %p63
      %p216 = pneg %p60
      %p217 = pneg %p84
      %p218 = pneg %p81
      %p219 = pneg %p105
      %p220 = pneg %p102
      %p221 = pneg %p126
      %p222 = pneg %p123
      %p223 = pneg %p152
      %p224 = pneg %p149
      %p225 = scmp.lt.s32.totalorder %s16, 1
      %s226 = scalar_select %p225, %s16, 1
      %s227 = smul.addr %s226, 3
      %s228 = smul.addr %s227, 8
      %s229 = scalar_lea.vmem %s5, %s228
      %p230 = scmp.lt.s32.totalorder %s16, 1
      %s231 = scalar_select %p230, %s16, 1
      %s232 = smul.addr %s231, 8
      %s233 = smul.addr %s232, 4
      %s234 = scalar_lea.vmem %s0, %s233
      %p235 = scmp.lt.s32.totalorder %s16, 1
      %s236 = scalar_select %p235, %s16, 1
      %s237 = smul.addr %s236, 3
      %s238 = smul.addr %s237, 8
      %s239 = scalar_lea.vmem %s1, %s238
      %p240 = scmp.lt.s32.totalorder %s16, 1
      %s241 = scalar_select %p240, %s16, 1
      %s242 = smul.addr %s241, 3
      %s243 = smul.addr %s242, 8
      %s244 = scalar_lea.vmem %s5, %s243
      %v246 = vld [vmem:[%s234] sm:$0xff]
      %v247 = vld [vmem:[%s234 + $0x8] sm:$0xf]
      %v248 = vld [vmem:[%s234 + $0x10] sm:$0xff]
      %v249 = vld [vmem:[%s234 + $0x18] sm:$0xf]
      %250 = vst [vmem:[#allocation2] sm:$0xff] %v246
      %251 = vst [vmem:[#allocation2 + $0x8] sm:$0xf] %v247
      %252 = vst [vmem:[#allocation2 + $0xc] sm:$0xff] %v248
      %253 = vst [vmem:[#allocation2 + $0x14] sm:$0xf] %v249
      %v254 = vld [vmem:[%s234] sm:$0xff]
      %v255 = vld [vmem:[%s234 + $0x8] sm:$0xff]
      %v256 = vld [vmem:[%s234 + $0x10] sm:$0xff]
      %v257 = vld [vmem:[%s234 + $0x18] sm:$0xff]
      %262 = vrot.lane.b32.xlu0 %v254, 127
      %v263 = vpop.permute.xlu0 %262
      %264 = vrot.lane.b32.xlu0 %v255, 127
      %v265 = vpop.permute.xlu0 %264
      %266 = vrot.lane.b32.xlu0 %v256, 127
      %v267 = vpop.permute.xlu0 %266
      %268 = vrot.lane.b32.xlu0 %v257, 127
      %v269 = vpop.permute.xlu0 %268
      %v270 = vrot.slane %v263, 4
      %v271 = vrot.slane %v265, 4
      %v272 = vrot.slane %v267, 4
      %v273 = vrot.slane %v269, 4
      %vm274 = vcmask 1043456
      %v275 = vsel %vm274, %v270, %v271
      %vm276 = vcmask 1039360
      %v277 = vsel %vm276, %v263, %v275
      %v278 = vsel %vm276, %v265, %v271
      %v279 = vsel %vm274, %v272, %v273
      %v280 = vsel %vm276, %v267, %v279
      %v281 = vsel %vm276, %v269, %v273
      %286 = vst [vmem:[#allocation2 + $0x18] sm:$0xff] %v277
      %287 = vst [vmem:[#allocation2 + $0x20] sm:$0xf] %v278
      %288 = vst [vmem:[#allocation2 + $0x24] sm:$0xff] %v280
      %289 = vst [vmem:[#allocation2 + $0x2c] sm:$0xf] %v281
      %v290 = vld [vmem:[%s234] sm:$0xff]
      %v291 = vld [vmem:[%s234 + $0x8] sm:$0xff]
      %v292 = vld [vmem:[%s234 + $0x10] sm:$0xff]
      %v293 = vld [vmem:[%s234 + $0x18] sm:$0xff]
      %298 = vrot.lane.b32.xlu0 %v290, 126
      %v299 = vpop.permute.xlu0 %298
      %300 = vrot.lane.b32.xlu0 %v291, 126
      %v301 = vpop.permute.xlu0 %300
      %302 = vrot.lane.b32.xlu0 %v292, 126
      %v303 = vpop.permute.xlu0 %302
      %304 = vrot.lane.b32.xlu0 %v293, 126
      %v305 = vpop.permute.xlu0 %304
      %v306 = vrot.slane %v299, 4
      %v307 = vrot.slane %v301, 4
      %v308 = vrot.slane %v303, 4
      %v309 = vrot.slane %v305, 4
      %v310 = vsel %vm274, %v306, %v307
      %vm311 = vcmask 1031168
      %v312 = vsel %vm311, %v299, %v310
      %v313 = vsel %vm311, %v301, %v307
      %v314 = vsel %vm274, %v308, %v309
      %v315 = vsel %vm311, %v303, %v314
      %v316 = vsel %vm311, %v305, %v309
      %321 = vst [vmem:[#allocation2 + $0x30] sm:$0xff] %v312
      %322 = vst [vmem:[#allocation2 + $0x38] sm:$0xf] %v313
      %323 = vst [vmem:[#allocation2 + $0x3c] sm:$0xff] %v315
      %324 = vst [vmem:[#allocation2 + $0x44] sm:$0xf] %v316
      %v325 = vld [vmem:[%s234] sm:$0xff]
      %v326 = vld [vmem:[%s234 + $0x8] sm:$0xff]
      %v327 = vld [vmem:[%s234 + $0x10] sm:$0xff]
      %v328 = vld [vmem:[%s234 + $0x18] sm:$0xff]
      %333 = vrot.lane.b32.xlu0 %v325, 110
      %v334 = vpop.permute.xlu0 %333
      %335 = vrot.lane.b32.xlu0 %v326, 110
      %v336 = vpop.permute.xlu0 %335
      %337 = vrot.lane.b32.xlu0 %v327, 110
      %v338 = vpop.permute.xlu0 %337
      %339 = vrot.lane.b32.xlu0 %v328, 110
      %v340 = vpop.permute.xlu0 %339
      %v341 = vrot.slane %v334, 4
      %v342 = vrot.slane %v336, 4
      %v343 = vrot.slane %v338, 4
      %v344 = vrot.slane %v340, 4
      %v345 = vsel %vm274, %v341, %v342
      %vm346 = vcmask 900096
      %v347 = vsel %vm346, %v334, %v345
      %v348 = vsel %vm346, %v336, %v342
      %v349 = vsel %vm274, %v343, %v344
      %v350 = vsel %vm346, %v338, %v349
      %v351 = vsel %vm346, %v340, %v344
      %356 = vst [vmem:[#allocation2 + $0x48] sm:$0xff] %v347
      %357 = vst [vmem:[#allocation2 + $0x50] sm:$0xf] %v348
      %358 = vst [vmem:[#allocation2 + $0x54] sm:$0xff] %v350
      %359 = vst [vmem:[#allocation2 + $0x5c] sm:$0xf] %v351
      %v360 = vld [vmem:[%s234] sm:$0xff]
      %v361 = vld [vmem:[%s234 + $0x8] sm:$0xff]
      %v362 = vld [vmem:[%s234 + $0x10] sm:$0xff]
      %v363 = vld [vmem:[%s234 + $0x18] sm:$0xff]
      %368 = vrot.lane.b32.xlu0 %v360, 109
      %v369 = vpop.permute.xlu0 %368
      %370 = vrot.lane.b32.xlu0 %v361, 109
      %v371 = vpop.permute.xlu0 %370
      %372 = vrot.lane.b32.xlu0 %v362, 109
      %v373 = vpop.permute.xlu0 %372
      %374 = vrot.lane.b32.xlu0 %v363, 109
      %v375 = vpop.permute.xlu0 %374
      %v376 = vrot.slane %v369, 4
      %v377 = vrot.slane %v371, 4
      %v378 = vrot.slane %v373, 4
      %v379 = vrot.slane %v375, 4
      %v380 = vsel %vm274, %v376, %v377
      %vm381 = vcmask 891904
      %v382 = vsel %vm381, %v369, %v380
      %v383 = vsel %vm381, %v371, %v377
      %v384 = vsel %vm274, %v378, %v379
      %v385 = vsel %vm381, %v373, %v384
      %v386 = vsel %vm381, %v375, %v379
      %391 = vst [vmem:[#allocation2 + $0x60] sm:$0xff] %v382
      %392 = vst [vmem:[#allocation2 + $0x68] sm:$0xf] %v383
      %393 = vst [vmem:[#allocation2 + $0x6c] sm:$0xff] %v385
      %394 = vst [vmem:[#allocation2 + $0x74] sm:$0xf] %v386
      %v395 = vld [vmem:[%s234] sm:$0xff]
      %v396 = vld [vmem:[%s234 + $0x8] sm:$0xff]
      %v397 = vld [vmem:[%s234 + $0x10] sm:$0xff]
      %v398 = vld [vmem:[%s234 + $0x18] sm:$0xff]
      %403 = vrot.lane.b32.xlu0 %v395, 108
      %v404 = vpop.permute.xlu0 %403
      %405 = vrot.lane.b32.xlu0 %v396, 108
      %v406 = vpop.permute.xlu0 %405
      %407 = vrot.lane.b32.xlu0 %v397, 108
      %v408 = vpop.permute.xlu0 %407
      %409 = vrot.lane.b32.xlu0 %v398, 108
      %v410 = vpop.permute.xlu0 %409
      %v411 = vrot.slane %v404, 4
      %v412 = vrot.slane %v406, 4
      %v413 = vrot.slane %v408, 4
      %v414 = vrot.slane %v410, 4
      %v415 = vsel %vm274, %v411, %v412
      %vm416 = vcmask 883712
      %v417 = vsel %vm416, %v404, %v415
      %v418 = vsel %vm416, %v406, %v412
      %v419 = vsel %vm274, %v413, %v414
      %v420 = vsel %vm416, %v408, %v419
      %v421 = vsel %vm416, %v410, %v414
      %426 = vst [vmem:[#allocation2 + $0x78] sm:$0xff] %v417
      %427 = vst [vmem:[#allocation2 + $0x80] sm:$0xf] %v418
      %428 = vst [vmem:[#allocation2 + $0x84] sm:$0xff] %v420
      %429 = vst [vmem:[#allocation2 + $0x8c] sm:$0xf] %v421
      %v430 = vld [vmem:[%s234] sm:$0xff]
      %v431 = vld [vmem:[%s234 + $0x8] sm:$0xff]
      %v432 = vld [vmem:[%s234 + $0x10] sm:$0xff]
      %v433 = vld [vmem:[%s234 + $0x18] sm:$0xff]
      %438 = vrot.lane.b32.xlu0 %v430, 92
      %v439 = vpop.permute.xlu0 %438
      %440 = vrot.lane.b32.xlu0 %v431, 92
      %v441 = vpop.permute.xlu0 %440
      %442 = vrot.lane.b32.xlu0 %v432, 92
      %v443 = vpop.permute.xlu0 %442
      %444 = vrot.lane.b32.xlu0 %v433, 92
      %v445 = vpop.permute.xlu0 %444
      %v446 = vrot.slane %v439, 4
      %v447 = vrot.slane %v441, 4
      %v448 = vrot.slane %v443, 4
      %v449 = vrot.slane %v445, 4
      %v450 = vsel %vm274, %v446, %v447
      %vm451 = vcmask 752640
      %v452 = vsel %vm451, %v439, %v450
      %v453 = vsel %vm451, %v441, %v447
      %v454 = vsel %vm274, %v448, %v449
      %v455 = vsel %vm451, %v443, %v454
      %v456 = vsel %vm451, %v445, %v449
      %461 = vst [vmem:[#allocation2 + $0x90] sm:$0xff] %v452
      %462 = vst [vmem:[#allocation2 + $0x98] sm:$0xf] %v453
      %463 = vst [vmem:[#allocation2 + $0x9c] sm:$0xff] %v455
      %464 = vst [vmem:[#allocation2 + $0xa4] sm:$0xf] %v456
      %v465 = vld [vmem:[%s234] sm:$0xff]
      %v466 = vld [vmem:[%s234 + $0x8] sm:$0xff]
      %v467 = vld [vmem:[%s234 + $0x10] sm:$0xff]
      %v468 = vld [vmem:[%s234 + $0x18] sm:$0xff]
      %473 = vrot.lane.b32.xlu0 %v465, 91
      %v474 = vpop.permute.xlu0 %473
      %475 = vrot.lane.b32.xlu0 %v466, 91
      %v476 = vpop.permute.xlu0 %475
      %477 = vrot.lane.b32.xlu0 %v467, 91
      %v478 = vpop.permute.xlu0 %477
      %479 = vrot.lane.b32.xlu0 %v468, 91
      %v480 = vpop.permute.xlu0 %479
      %v481 = vrot.slane %v474, 4
      %v482 = vrot.slane %v476, 4
      %v483 = vrot.slane %v478, 4
      %v484 = vrot.slane %v480, 4
      %v485 = vsel %vm274, %v481, %v482
      %vm486 = vcmask 744448
      %v487 = vsel %vm486, %v474, %v485
      %v488 = vsel %vm486, %v476, %v482
      %v489 = vsel %vm274, %v483, %v484
      %v490 = vsel %vm486, %v478, %v489
      %v491 = vsel %vm486, %v480, %v484
      %496 = vst [vmem:[#allocation2 + $0xa8] sm:$0xff] %v487
      %497 = vst [vmem:[#allocation2 + $0xb0] sm:$0xf] %v488
      %498 = vst [vmem:[#allocation2 + $0xb4] sm:$0xff] %v490
      %499 = vst [vmem:[#allocation2 + $0xbc] sm:$0xf] %v491
      %v500 = vld [vmem:[%s234] sm:$0xff]
      %v501 = vld [vmem:[%s234 + $0x8] sm:$0xff]
      %v502 = vld [vmem:[%s234 + $0x10] sm:$0xff]
      %v503 = vld [vmem:[%s234 + $0x18] sm:$0xff]
      %508 = vrot.lane.b32.xlu0 %v500, 90
      %v509 = vpop.permute.xlu0 %508
      %510 = vrot.lane.b32.xlu0 %v501, 90
      %v511 = vpop.permute.xlu0 %510
      %512 = vrot.lane.b32.xlu0 %v502, 90
      %v513 = vpop.permute.xlu0 %512
      %514 = vrot.lane.b32.xlu0 %v503, 90
      %v515 = vpop.permute.xlu0 %514
      %v516 = vrot.slane %v509, 4
      %v517 = vrot.slane %v511, 4
      %v518 = vrot.slane %v513, 4
      %v519 = vrot.slane %v515, 4
      %v520 = vsel %vm274, %v516, %v517
      %vm521 = vcmask 736256
      %v522 = vsel %vm521, %v509, %v520
      %v523 = vsel %vm521, %v511, %v517
      %v524 = vsel %vm274, %v518, %v519
      %v525 = vsel %vm521, %v513, %v524
      %v526 = vsel %vm521, %v515, %v519
      %531 = vst [vmem:[#allocation2 + $0xc0] sm:$0xff] %v522
      %532 = vst [vmem:[#allocation2 + $0xc8] sm:$0xf] %v523
      %533 = vst [vmem:[#allocation2 + $0xcc] sm:$0xff] %v525
      %534 = vst [vmem:[#allocation2 + $0xd4] sm:$0xf] %v526
      %v535 = vld [vmem:[%s2] sm:$0xff]
      %v536 = vld [vmem:[%s2 + $0x8] sm:$0xff]
      %v537 = vld [vmem:[%s2 + $0x10] sm:$0xff]
      %v538 = vld [vmem:[#allocation2] sm:$0xff]
      %v539 = vld [vmem:[#allocation2 + $0x8] sm:$0xf]
      %v540 = vld [vmem:[#allocation2 + $0xc] sm:$0xff]
      %v541 = vld [vmem:[#allocation2 + $0x14] sm:$0xf]
      %v542 = vld [vmem:[#allocation2 + $0x18] sm:$0xff]
      %v543 = vld [vmem:[#allocation2 + $0x20] sm:$0xf]
      %v544 = vld [vmem:[#allocation2 + $0x24] sm:$0xff]
      %v545 = vld [vmem:[#allocation2 + $0x2c] sm:$0xf]
      %v546 = vld [vmem:[#allocation2 + $0x30] sm:$0xff]
      %v547 = vld [vmem:[#allocation2 + $0x38] sm:$0xf]
      %v548 = vld [vmem:[#allocation2 + $0x3c] sm:$0xff]
      %v549 = vld [vmem:[#allocation2 + $0x44] sm:$0xf]
      %v550 = vld [vmem:[#allocation2 + $0x48] sm:$0xff]
      %v551 = vld [vmem:[#allocation2 + $0x50] sm:$0xf]
      %v552 = vld [vmem:[#allocation2 + $0x54] sm:$0xff]
      %v553 = vld [vmem:[#allocation2 + $0x5c] sm:$0xf]
      %v554 = vld [vmem:[#allocation2 + $0x60] sm:$0xff]
      %v555 = vld [vmem:[#allocation2 + $0x68] sm:$0xf]
      %v556 = vld [vmem:[#allocation2 + $0x6c] sm:$0xff]
      %v557 = vld [vmem:[#allocation2 + $0x74] sm:$0xf]
      %v558 = vld [vmem:[#allocation2 + $0x78] sm:$0xff]
      %v559 = vld [vmem:[#allocation2 + $0x80] sm:$0xf]
      %v560 = vld [vmem:[#allocation2 + $0x84] sm:$0xff]
      %v561 = vld [vmem:[#allocation2 + $0x8c] sm:$0xf]
      %v562 = vld [vmem:[#allocation2 + $0x90] sm:$0xff]
      %v563 = vld [vmem:[#allocation2 + $0x98] sm:$0xf]
      %v564 = vld [vmem:[#allocation2 + $0x9c] sm:$0xff]
      %v565 = vld [vmem:[#allocation2 + $0xa4] sm:$0xf]
      %v566 = vld [vmem:[#allocation2 + $0xa8] sm:$0xff]
      %v567 = vld [vmem:[#allocation2 + $0xb0] sm:$0xf]
      %v568 = vld [vmem:[#allocation2 + $0xb4] sm:$0xff]
      %v569 = vld [vmem:[#allocation2 + $0xbc] sm:$0xf]
      %v570 = vld [vmem:[#allocation2 + $0xc0] sm:$0xff]
      %v571 = vld [vmem:[#allocation2 + $0xc8] sm:$0xf]
      %v572 = vld [vmem:[#allocation2 + $0xcc] sm:$0xff]
      %v573 = vld [vmem:[#allocation2 + $0xd4] sm:$0xf]
      %v574 = vld [vmem:[%s4] sm:$0xff]
      %v575 = vld [vmem:[%s4 + $0x8] sm:$0xff]
      %v576 = vld [vmem:[%s4 + $0x10] sm:$0xff]
      %578 = vset.pattern.permute.xlu0 0
      %579 = vperm.xlu0 %578, %v574
      %v580 = vpop.permute.xlu0 %579
      %583 = vset.pattern.permute.xlu0 0
      %584 = vperm.xlu0 %583, %v575
      %v585 = vpop.permute.xlu0 %584
      %588 = vset.pattern.permute.xlu0 0
      %589 = vperm.xlu0 %588, %v576
      %v590 = vpop.permute.xlu0 %589
      %v595 = vunpack.c.l.b16 %v535
      %v596 = vunpack.c.h.b16 %v535
      %v597 = vunpack.c.l.b16 %v536
      %v598 = vunpack.c.h.b16 %v536
      %v599 = vunpack.c.l.b16 %v537
      %v600 = vunpack.c.h.b16 %v537
      %v601 = vpack.c.b16 %v597, %v595
      %v602 = vpack.c.b16 %v598, %v596
      %v603 = vpack.c.b16 %v599, %v599
      %v604 = vpack.c.b16 %v600, %v600
      %v643 = vunpack.c.l.b16 %v538
      %v644 = vunpack.c.h.b16 %v538
      %v645 = vunpack.c.l.b16 %v539
      %v646 = vunpack.c.l.b16 %v540
      %v647 = vunpack.c.h.b16 %v540
      %v648 = vunpack.c.l.b16 %v541
      %v649 = vunpack.c.l.b16 %v542
      %v650 = vunpack.c.h.b16 %v542
      %v651 = vunpack.c.l.b16 %v543
      %v652 = vunpack.c.l.b16 %v544
      %v653 = vunpack.c.h.b16 %v544
      %v654 = vunpack.c.l.b16 %v545
      %v655 = vunpack.c.l.b16 %v546
      %v656 = vunpack.c.h.b16 %v546
      %v657 = vunpack.c.l.b16 %v547
      %v658 = vunpack.c.l.b16 %v548
      %v659 = vunpack.c.h.b16 %v548
      %v660 = vunpack.c.l.b16 %v549
      %v661 = vunpack.c.l.b16 %v550
      %v662 = vunpack.c.h.b16 %v550
      %v663 = vunpack.c.l.b16 %v551
      %v664 = vunpack.c.l.b16 %v552
      %v665 = vunpack.c.h.b16 %v552
      %v666 = vunpack.c.l.b16 %v553
      %v667 = vunpack.c.l.b16 %v554
      %v668 = vunpack.c.h.b16 %v554
      %v669 = vunpack.c.l.b16 %v555
      %v670 = vunpack.c.l.b16 %v556
      %v671 = vunpack.c.h.b16 %v556
      %v672 = vunpack.c.l.b16 %v557
      %v673 = vunpack.c.l.b16 %v558
      %v674 = vunpack.c.h.b16 %v558
      %v675 = vunpack.c.l.b16 %v559
      %v676 = vunpack.c.l.b16 %v560
      %v677 = vunpack.c.h.b16 %v560
      %v678 = vunpack.c.l.b16 %v561
      %v679 = vunpack.c.l.b16 %v562
      %v680 = vunpack.c.h.b16 %v562
      %v681 = vunpack.c.l.b16 %v563
      %v682 = vunpack.c.l.b16 %v564
      %v683 = vunpack.c.h.b16 %v564
      %v684 = vunpack.c.l.b16 %v565
      %v685 = vunpack.c.l.b16 %v566
      %v686 = vunpack.c.h.b16 %v566
      %v687 = vunpack.c.l.b16 %v567
      %v688 = vunpack.c.l.b16 %v568
      %v689 = vunpack.c.h.b16 %v568
      %v690 = vunpack.c.l.b16 %v569
      %v691 = vunpack.c.l.b16 %v570
      %v692 = vunpack.c.h.b16 %v570
      %v693 = vunpack.c.l.b16 %v571
      %v694 = vunpack.c.l.b16 %v572
      %v695 = vunpack.c.h.b16 %v572
      %v696 = vunpack.c.l.b16 %v573
      %v697 = vpack.c.b16 %v646, %v643
      %v698 = vpack.c.b16 %v647, %v644
      %v699 = vpack.c.b16 %v648, %v645
      %v700 = vpack.c.b16 %v652, %v649
      %v701 = vpack.c.b16 %v653, %v650
      %v702 = vpack.c.b16 %v654, %v651
      %v703 = vpack.c.b16 %v658, %v655
      %v704 = vpack.c.b16 %v659, %v656
      %v705 = vpack.c.b16 %v660, %v657
      %v706 = vpack.c.b16 %v664, %v661
      %v707 = vpack.c.b16 %v665, %v662
      %v708 = vpack.c.b16 %v666, %v663
      %v709 = vpack.c.b16 %v670, %v667
      %v710 = vpack.c.b16 %v671, %v668
      %v711 = vpack.c.b16 %v672, %v669
      %v712 = vpack.c.b16 %v676, %v673
      %v713 = vpack.c.b16 %v677, %v674
      %v714 = vpack.c.b16 %v678, %v675
      %v715 = vpack.c.b16 %v682, %v679
      %v716 = vpack.c.b16 %v683, %v680
      %v717 = vpack.c.b16 %v684, %v681
      %v718 = vpack.c.b16 %v688, %v685
      %v719 = vpack.c.b16 %v689, %v686
      %v720 = vpack.c.b16 %v690, %v687
      %v721 = vpack.c.b16 %v694, %v691
      %v722 = vpack.c.b16 %v695, %v692
      %v723 = vpack.c.b16 %v696, %v693
      %vm751 = vcmask 130048
      %v753 = vsel %vm751, %v602, 0
      %v756 = vsel %vm751, %v604, 0
      %758 = vmatprep.subr.bf16.mxu0 %v719
      %759 = vmatpush1.bf16.msra.mxu0 %v718
      %760 = vmatprep.subr.bf16.mxu0 %v716
      %761 = vmatpush1.bf16.msra.mxu0 %v715
      %762 = vmatprep.subr.bf16.mxu0 %v713
      %763 = vmatpush1.bf16.msra.mxu0 %v712
      %764 = vmatprep.subr.bf16.mxu0 %v710
      %765 = vmatpush1.bf16.msra.mxu0 %v709
      %766 = vmatprep.subr.bf16.mxu0 %v707
      %767 = vmatpush1.bf16.msra.mxu0 %v706
      %768 = vmatprep.subr.bf16.mxu0 %v704
      %769 = vmatpush1.bf16.msra.mxu0 %v703
      %770 = vmatprep.subr.bf16.mxu0 %v701
      %771 = vmatpush1.bf16.msra.mxu0 %v700
      %772 = vmatprep.subr.bf16.mxu0 %v698
      %773 = vmatpush1.bf16.msra.mxu0 %v697
      %774 = vmatprep.subr.bf16.mxu0 0
      %775 = vmatpush2.bf16.msra.mxu0 0
      %776 = vmatprep.subr.bf16.mxu0 0
      %777 = vmatpush2.bf16.msra.mxu0 0
      %778 = vmatprep.subr.bf16.mxu0 0
      %779 = vmatpush2.bf16.msra.mxu0 0
      %780 = vmatprep.subr.bf16.mxu0 0
      %781 = vmatpush2.bf16.msra.mxu0 0
      %782 = vmatprep.subr.bf16.mxu0 0
      %783 = vmatpush2.bf16.msra.mxu0 0
      %784 = vmatprep.subr.bf16.mxu0 0
      %785 = vmatpush2.bf16.msra.mxu0 0
      %786 = vmatprep.subr.bf16.mxu0 0
      %787 = vmatpush2.bf16.msra.mxu0 0
      %788 = vmatprep.subr.bf16.mxu0 %v722
      %789 = vmatpush2.bf16.msra.mxu0 %v721
      %790 = vmatprep.mubr.bf16.mxu0 %v753
      %791 = vmatmul.mubr.bf16.gmra.mxu0 %v601
      %v792 = vpop.f32.mrf.mxu0
      %v793 = vadd.f32 %v580, %v792
      %v794 = vpop.f32.mrf.mxu0
      %v795 = vadd.f32 %v580, %v794
      %v796 = vpop.f32.mrf.mxu0
      %v797 = vadd.f32 %v585, %v796
      %v798 = vpop.f32.mrf.mxu0
      %v799 = vadd.f32 %v585, %v798
      %800 = vmatprep.mubr.bf16.mxu0 %v756
      %801 = vmatmul.mubr.bf16.gmra.mxu0 %v603
      %v802 = vpop.f32.mrf.mxu0
      %v803 = vadd.f32 %v590, %v802
      %v804 = vpop.f32.mrf.mxu0
      %v805 = vadd.f32 %v590, %v804
      %v806 = vpop.f32.mrf.mxu0
      %v807 = vpop.f32.mrf.mxu0
      %808 = vdwg.mxu0
      %809 = vmatprep.subr.bf16.mxu0 0
      %810 = vmatpush1.bf16.msra.mxu0 %v720
      %811 = vmatprep.subr.bf16.mxu0 0
      %812 = vmatpush1.bf16.msra.mxu0 %v717
      %813 = vmatprep.subr.bf16.mxu0 0
      %814 = vmatpush1.bf16.msra.mxu0 %v714
      %815 = vmatprep.subr.bf16.mxu0 0
      %816 = vmatpush1.bf16.msra.mxu0 %v711
      %817 = vmatprep.subr.bf16.mxu0 0
      %818 = vmatpush1.bf16.msra.mxu0 %v708
      %819 = vmatprep.subr.bf16.mxu0 0
      %820 = vmatpush1.bf16.msra.mxu0 %v705
      %821 = vmatprep.subr.bf16.mxu0 0
      %822 = vmatpush1.bf16.msra.mxu0 %v702
      %823 = vmatprep.subr.bf16.mxu0 0
      %824 = vmatpush1.bf16.msra.mxu0 %v699
      %825 = vmatprep.subr.bf16.mxu0 0
      %826 = vmatpush2.bf16.msra.mxu0 0
      %827 = vmatprep.subr.bf16.mxu0 0
      %828 = vmatpush2.bf16.msra.mxu0 0
      %829 = vmatprep.subr.bf16.mxu0 0
      %830 = vmatpush2.bf16.msra.mxu0 0
      %831 = vmatprep.subr.bf16.mxu0 0
      %832 = vmatpush2.bf16.msra.mxu0 0
      %833 = vmatprep.subr.bf16.mxu0 0
      %834 = vmatpush2.bf16.msra.mxu0 0
      %835 = vmatprep.subr.bf16.mxu0 0
      %836 = vmatpush2.bf16.msra.mxu0 0
      %837 = vmatprep.subr.bf16.mxu0 0
      %838 = vmatpush2.bf16.msra.mxu0 0
      %839 = vmatprep.subr.bf16.mxu0 0
      %840 = vmatpush2.bf16.msra.mxu0 %v723
      %841 = vmatprep.mubr.bf16.mxu0 %v753
      %842 = vmatmul.mubr.bf16.gmra.mxu0 %v601
      %v843 = vpop.f32.mrf.mxu0
      %v844 = vadd.f32 %v580, %v843
      %v845 = vpop.f32.mrf.mxu0
      %v846 = vpop.f32.mrf.mxu0
      %v847 = vadd.f32 %v585, %v846
      %v848 = vpop.f32.mrf.mxu0
      %849 = vmatprep.mubr.bf16.mxu0 %v756
      %850 = vmatmul.mubr.bf16.gmra.mxu0 %v603
      %v851 = vpop.f32.mrf.mxu0
      %v852 = vadd.f32 %v590, %v851
      %v853 = vpop.f32.mrf.mxu0
      %v854 = vpop.f32.mrf.mxu0
      %v855 = vpop.f32.mrf.mxu0
      %856 = vdwg.mxu0
      %v857 = vxor.u32 %v793, 2147483648
      %v858 = vxor.u32 %v795, 2147483648
      %v859 = vxor.u32 %v844, 2147483648
      %v860 = vmul.f32 %v857, 1.442695
      %v861 = vpow.pop %v860
      %v862 = vmul.f32 %v858, 1.442695
      %v863 = vpow.pop %v862
      %v864 = vmul.f32 %v859, 1.442695
      %v865 = vpow.pop %v864
      %v866 = vadd.f32 %v861, 1.0
      %v867 = vadd.f32 %v863, 1.0
      %v868 = vadd.f32 %v865, 1.0
      %v869 = vrcp.pop %v866
      %v870 = vmul.f32 1.0, %v869
      %v871 = vrcp.pop %v867
      %v872 = vmul.f32 1.0, %v871
      %v873 = vrcp.pop %v868
      %v874 = vmul.f32 1.0, %v873
      %v875 = vxor.u32 %v797, 2147483648
      %v876 = vxor.u32 %v799, 2147483648
      %v877 = vxor.u32 %v847, 2147483648
      %v878 = vmul.f32 %v875, 1.442695
      %v879 = vpow.pop %v878
      %v880 = vmul.f32 %v876, 1.442695
      %v881 = vpow.pop %v880
      %v882 = vmul.f32 %v877, 1.442695
      %v883 = vpow.pop %v882
      %v884 = vadd.f32 %v879, 1.0
      %v885 = vadd.f32 %v881, 1.0
      %v886 = vadd.f32 %v883, 1.0
      %v887 = vrcp.pop %v884
      %v888 = vmul.f32 1.0, %v887
      %v889 = vrcp.pop %v885
      %v890 = vmul.f32 1.0, %v889
      %v891 = vrcp.pop %v886
      %v892 = vmul.f32 1.0, %v891
      %v893 = vld [vmem:[%s239] sm:$0xff]
      %v894 = vld [vmem:[%s239 + $0x8] sm:$0xff]
      %v895 = vld [vmem:[%s239 + $0x10] sm:$0xff]
      %v896 = vmul.f32 %v893, %v888
      %v897 = vmul.f32 %v894, %v890
      %v898 = vmul.f32 %v895, %v892
      %v899 = vpack.c.bf16 0.0, %v896
      %v900 = vpack.c.bf16 0.0, %v897
      %v901 = vpack.c.bf16 0.0, %v898
      %v906 = vunpack.c.l.b16 0
      %v907 = vunpack.c.l.b16 %v899
      %v908 = vunpack.c.l.b16 %v900
      %v909 = vunpack.c.l.b16 %v901
      %v910 = vunpack.c.h.b16 0
      %v911 = vunpack.c.h.b16 %v899
      %v912 = vunpack.c.h.b16 %v900
      %v913 = vunpack.c.h.b16 %v901
      %v914 = vpack.c.b16 %v907, %v906
      %v915 = vpack.c.b16 %v909, %v908
      %v916 = vpack.c.b16 %v911, %v910
      %v917 = vpack.c.b16 %v913, %v912
      %918 = vrot.lane.b32.xlu0 %v914, 19
      %v919 = vpop.permute.xlu0 %918
      %920 = vrot.lane.b32.xlu0 %v915, 19
      %v921 = vpop.permute.xlu0 %920
      %922 = vrot.lane.b32.xlu0 %v916, 19
      %v923 = vpop.permute.xlu0 %922
      %924 = vrot.lane.b32.xlu0 %v917, 19
      %v925 = vpop.permute.xlu0 %924
      %v926 = vrot.slane %v919, 4
      %v927 = vrot.slane %v921, 4
      %v928 = vrot.slane %v923, 4
      %v929 = vrot.slane %v925, 4
      %v930 = vsel %vm274, %v926, %v927
      %vm931 = vcmask 154624
      %v932 = vsel %vm931, %v919, %v930
      %v933 = vsel %vm931, %v921, %v927
      %v934 = vsel %vm274, %v928, %v929
      %v935 = vsel %vm931, %v923, %v934
      %v936 = vsel %vm931, %v925, %v929
      %941 = vst [vmem:[#allocation3] sm:$0xff] %v932
      %942 = vst [vmem:[#allocation3 + $0x8] sm:$0xf] %v933
      %943 = vst [vmem:[#allocation3 + $0xc] sm:$0xff] %v935
      %944 = vst [vmem:[#allocation3 + $0x14] sm:$0xf] %v936
      %945 = vrot.lane.b32.xlu0 %v914, 18
      %v946 = vpop.permute.xlu0 %945
      %947 = vrot.lane.b32.xlu0 %v915, 18
      %v948 = vpop.permute.xlu0 %947
      %949 = vrot.lane.b32.xlu0 %v916, 18
      %v950 = vpop.permute.xlu0 %949
      %951 = vrot.lane.b32.xlu0 %v917, 18
      %v952 = vpop.permute.xlu0 %951
      %v953 = vrot.slane %v946, 4
      %v954 = vrot.slane %v948, 4
      %v955 = vrot.slane %v950, 4
      %v956 = vrot.slane %v952, 4
      %v957 = vsel %vm274, %v953, %v954
      %vm958 = vcmask 146432
      %v959 = vsel %vm958, %v946, %v957
      %v960 = vsel %vm958, %v948, %v954
      %v961 = vsel %vm274, %v955, %v956
      %v962 = vsel %vm958, %v950, %v961
      %v963 = vsel %vm958, %v952, %v956
      %968 = vst [vmem:[#allocation3 + $0x18] sm:$0xff] %v959
      %969 = vst [vmem:[#allocation3 + $0x20] sm:$0xf] %v960
      %970 = vst [vmem:[#allocation3 + $0x24] sm:$0xff] %v962
      %971 = vst [vmem:[#allocation3 + $0x2c] sm:$0xf] %v963
      %972 = vrot.lane.b32.xlu0 %v914, 17
      %v973 = vpop.permute.xlu0 %972
      %974 = vrot.lane.b32.xlu0 %v915, 17
      %v975 = vpop.permute.xlu0 %974
      %976 = vrot.lane.b32.xlu0 %v916, 17
      %v977 = vpop.permute.xlu0 %976
      %978 = vrot.lane.b32.xlu0 %v917, 17
      %v979 = vpop.permute.xlu0 %978
      %v980 = vrot.slane %v973, 4
      %v981 = vrot.slane %v975, 4
      %v982 = vrot.slane %v977, 4
      %v983 = vrot.slane %v979, 4
      %v984 = vsel %vm274, %v980, %v981
      %vm985 = vcmask 138240
      %v986 = vsel %vm985, %v973, %v984
      %v987 = vsel %vm985, %v975, %v981
      %v988 = vsel %vm274, %v982, %v983
      %v989 = vsel %vm985, %v977, %v988
      %v990 = vsel %vm985, %v979, %v983
      %995 = vst [vmem:[#allocation3 + $0x30] sm:$0xff] %v986
      %996 = vst [vmem:[#allocation3 + $0x38] sm:$0xf] %v987
      %997 = vst [vmem:[#allocation3 + $0x3c] sm:$0xff] %v989
      %998 = vst [vmem:[#allocation3 + $0x44] sm:$0xf] %v990
      %999 = vrot.lane.b32.xlu0 %v914, 1
      %v1000 = vpop.permute.xlu0 %999
      %1001 = vrot.lane.b32.xlu0 %v915, 1
      %v1002 = vpop.permute.xlu0 %1001
      %1003 = vrot.lane.b32.xlu0 %v916, 1
      %v1004 = vpop.permute.xlu0 %1003
      %1005 = vrot.lane.b32.xlu0 %v917, 1
      %v1006 = vpop.permute.xlu0 %1005
      %v1007 = vrot.slane %v1000, 4
      %v1008 = vrot.slane %v1002, 4
      %v1009 = vrot.slane %v1004, 4
      %v1010 = vrot.slane %v1006, 4
      %v1011 = vsel %vm274, %v1007, %v1008
      %vm1012 = vcmask 7168
      %v1013 = vsel %vm1012, %v1000, %v1011
      %v1014 = vsel %vm1012, %v1002, %v1008
      %v1015 = vsel %vm274, %v1009, %v1010
      %v1016 = vsel %vm1012, %v1004, %v1015
      %v1017 = vsel %vm1012, %v1006, %v1010
      %1022 = vst [vmem:[#allocation3 + $0x48] sm:$0xff] %v1013
      %1023 = vst [vmem:[#allocation3 + $0x50] sm:$0xf] %v1014
      %1024 = vst [vmem:[#allocation3 + $0x54] sm:$0xff] %v1016
      %1025 = vst [vmem:[#allocation3 + $0x5c] sm:$0xf] %v1017
      %v1026 = vpack.c.b16 %v908, %v907
      %v1027 = vpack.c.b16 %v909, %v909
      %v1028 = vpack.c.b16 %v912, %v911
      %v1029 = vpack.c.b16 %v913, %v913
      %1034 = vst [vmem:[#allocation3 + $0x60] sm:$0xff] %v1026
      %1035 = vst [vmem:[#allocation3 + $0x68] sm:$0xf] %v1027
      %1036 = vst [vmem:[#allocation3 + $0x6c] sm:$0xff] %v1028
      %1037 = vst [vmem:[#allocation3 + $0x74] sm:$0xf] %v1029
      %v1038 = vpack.c.b16 %v906, %v909
      %v1039 = vpack.c.b16 %v910, %v913
      %1040 = vrot.lane.b32.xlu0 %v1026, 127
      %v1041 = vpop.permute.xlu0 %1040
      %1042 = vrot.lane.b32.xlu0 %v1038, 127
      %v1043 = vpop.permute.xlu0 %1042
      %1044 = vrot.lane.b32.xlu0 %v1028, 127
      %v1045 = vpop.permute.xlu0 %1044
      %1046 = vrot.lane.b32.xlu0 %v1039, 127
      %v1047 = vpop.permute.xlu0 %1046
      %v1048 = vrot.slane %v1041, 4
      %v1049 = vrot.slane %v1043, 4
      %v1050 = vrot.slane %v1045, 4
      %v1051 = vrot.slane %v1047, 4
      %v1052 = vsel %vm274, %v1048, %v1049
      %v1053 = vsel %vm276, %v1041, %v1052
      %v1054 = vsel %vm276, %v1043, %v1049
      %v1055 = vsel %vm274, %v1050, %v1051
      %v1056 = vsel %vm276, %v1045, %v1055
      %v1057 = vsel %vm276, %v1047, %v1051
      %1062 = vst [vmem:[#allocation3 + $0x78] sm:$0xff] %v1053
      %1063 = vst [vmem:[#allocation3 + $0x80] sm:$0xf] %v1054
      %1064 = vst [vmem:[#allocation3 + $0x84] sm:$0xff] %v1056
      %1065 = vst [vmem:[#allocation3 + $0x8c] sm:$0xf] %v1057
      %1066 = vrot.lane.b32.xlu0 %v1026, 111
      %v1067 = vpop.permute.xlu0 %1066
      %1068 = vrot.lane.b32.xlu0 %v1038, 111
      %v1069 = vpop.permute.xlu0 %1068
      %1070 = vrot.lane.b32.xlu0 %v1028, 111
      %v1071 = vpop.permute.xlu0 %1070
      %1072 = vrot.lane.b32.xlu0 %v1039, 111
      %v1073 = vpop.permute.xlu0 %1072
      %v1074 = vrot.slane %v1067, 4
      %v1075 = vrot.slane %v1069, 4
      %v1076 = vrot.slane %v1071, 4
      %v1077 = vrot.slane %v1073, 4
      %v1078 = vsel %vm274, %v1074, %v1075
      %vm1079 = vcmask 908288
      %v1080 = vsel %vm1079, %v1067, %v1078
      %v1081 = vsel %vm1079, %v1069, %v1075
      %v1082 = vsel %vm274, %v1076, %v1077
      %v1083 = vsel %vm1079, %v1071, %v1082
      %v1084 = vsel %vm1079, %v1073, %v1077
      %1089 = vst [vmem:[#allocation3 + $0x90] sm:$0xff] %v1080
      %1090 = vst [vmem:[#allocation3 + $0x98] sm:$0xf] %v1081
      %1091 = vst [vmem:[#allocation3 + $0x9c] sm:$0xff] %v1083
      %1092 = vst [vmem:[#allocation3 + $0xa4] sm:$0xf] %v1084
      %1093 = vrot.lane.b32.xlu0 %v1026, 110
      %v1094 = vpop.permute.xlu0 %1093
      %1095 = vrot.lane.b32.xlu0 %v1038, 110
      %v1096 = vpop.permute.xlu0 %1095
      %1097 = vrot.lane.b32.xlu0 %v1028, 110
      %v1098 = vpop.permute.xlu0 %1097
      %1099 = vrot.lane.b32.xlu0 %v1039, 110
      %v1100 = vpop.permute.xlu0 %1099
      %v1101 = vrot.slane %v1094, 4
      %v1102 = vrot.slane %v1096, 4
      %v1103 = vrot.slane %v1098, 4
      %v1104 = vrot.slane %v1100, 4
      %v1105 = vsel %vm274, %v1101, %v1102
      %v1106 = vsel %vm346, %v1094, %v1105
      %v1107 = vsel %vm346, %v1096, %v1102
      %v1108 = vsel %vm274, %v1103, %v1104
      %v1109 = vsel %vm346, %v1098, %v1108
      %v1110 = vsel %vm346, %v1100, %v1104
      %1115 = vst [vmem:[#allocation3 + $0xa8] sm:$0xff] %v1106
      %1116 = vst [vmem:[#allocation3 + $0xb0] sm:$0xf] %v1107
      %1117 = vst [vmem:[#allocation3 + $0xb4] sm:$0xff] %v1109
      %1118 = vst [vmem:[#allocation3 + $0xbc] sm:$0xf] %v1110
      %1119 = vrot.lane.b32.xlu0 %v1026, 109
      %v1120 = vpop.permute.xlu0 %1119
      %1121 = vrot.lane.b32.xlu0 %v1038, 109
      %v1122 = vpop.permute.xlu0 %1121
      %1123 = vrot.lane.b32.xlu0 %v1028, 109
      %v1124 = vpop.permute.xlu0 %1123
      %1125 = vrot.lane.b32.xlu0 %v1039, 109
      %v1126 = vpop.permute.xlu0 %1125
      %v1127 = vrot.slane %v1120, 4
      %v1128 = vrot.slane %v1122, 4
      %v1129 = vrot.slane %v1124, 4
      %v1130 = vrot.slane %v1126, 4
      %v1131 = vsel %vm274, %v1127, %v1128
      %v1132 = vsel %vm381, %v1120, %v1131
      %v1133 = vsel %vm381, %v1122, %v1128
      %v1134 = vsel %vm274, %v1129, %v1130
      %v1135 = vsel %vm381, %v1124, %v1134
      %v1136 = vsel %vm381, %v1126, %v1130
      %1141 = vst [vmem:[#allocation3 + $0xc0] sm:$0xff] %v1132
      %1142 = vst [vmem:[#allocation3 + $0xc8] sm:$0xf] %v1133
      %1143 = vst [vmem:[#allocation3 + $0xcc] sm:$0xff] %v1135
      %1144 = vst [vmem:[#allocation3 + $0xd4] sm:$0xf] %v1136
      %v1145 = vld [vmem:[%s3] sm:$0xff]
      %v1146 = vld [vmem:[#allocation3] sm:$0xff]
      %v1147 = vld [vmem:[#allocation3 + $0x8] sm:$0xf]
      %v1148 = vld [vmem:[#allocation3 + $0xc] sm:$0xff]
      %v1149 = vld [vmem:[#allocation3 + $0x14] sm:$0xf]
      %v1150 = vld [vmem:[#allocation3 + $0x18] sm:$0xff]
      %v1151 = vld [vmem:[#allocation3 + $0x20] sm:$0xf]
      %v1152 = vld [vmem:[#allocation3 + $0x24] sm:$0xff]
      %v1153 = vld [vmem:[#allocation3 + $0x2c] sm:$0xf]
      %v1154 = vld [vmem:[#allocation3 + $0x30] sm:$0xff]
      %v1155 = vld [vmem:[#allocation3 + $0x38] sm:$0xf]
      %v1156 = vld [vmem:[#allocation3 + $0x3c] sm:$0xff]
      %v1157 = vld [vmem:[#allocation3 + $0x44] sm:$0xf]
      %v1158 = vld [vmem:[#allocation3 + $0x48] sm:$0xff]
      %v1159 = vld [vmem:[#allocation3 + $0x50] sm:$0xf]
      %v1160 = vld [vmem:[#allocation3 + $0x54] sm:$0xff]
      %v1161 = vld [vmem:[#allocation3 + $0x5c] sm:$0xf]
      %v1162 = vld [vmem:[#allocation3 + $0x60] sm:$0xff]
      %v1163 = vld [vmem:[#allocation3 + $0x68] sm:$0xf]
      %v1164 = vld [vmem:[#allocation3 + $0x6c] sm:$0xff]
      %v1165 = vld [vmem:[#allocation3 + $0x74] sm:$0xf]
      %v1166 = vld [vmem:[#allocation3 + $0x78] sm:$0xff]
      %v1167 = vld [vmem:[#allocation3 + $0x80] sm:$0xf]
      %v1168 = vld [vmem:[#allocation3 + $0x84] sm:$0xff]
      %v1169 = vld [vmem:[#allocation3 + $0x8c] sm:$0xf]
      %v1170 = vld [vmem:[#allocation3 + $0x90] sm:$0xff]
      %v1171 = vld [vmem:[#allocation3 + $0x98] sm:$0xf]
      %v1172 = vld [vmem:[#allocation3 + $0x9c] sm:$0xff]
      %v1173 = vld [vmem:[#allocation3 + $0xa4] sm:$0xf]
      %v1174 = vld [vmem:[#allocation3 + $0xa8] sm:$0xff]
      %v1175 = vld [vmem:[#allocation3 + $0xb0] sm:$0xf]
      %v1176 = vld [vmem:[#allocation3 + $0xb4] sm:$0xff]
      %v1177 = vld [vmem:[#allocation3 + $0xbc] sm:$0xf]
      %v1178 = vld [vmem:[#allocation3 + $0xc0] sm:$0xff]
      %v1179 = vld [vmem:[#allocation3 + $0xc8] sm:$0xf]
      %v1180 = vld [vmem:[#allocation3 + $0xcc] sm:$0xff]
      %v1181 = vld [vmem:[#allocation3 + $0xd4] sm:$0xf]
      %v1183 = vunpack.c.l.b16 %v1145
      %v1184 = vunpack.c.h.b16 %v1145
      %v1185 = vpack.c.b16 %v1183, %v1183
      %v1186 = vpack.c.b16 %v1184, %v1184
      %v1224 = vunpack.c.l.b16 %v1146
      %v1225 = vunpack.c.h.b16 %v1146
      %v1226 = vunpack.c.l.b16 %v1147
      %v1227 = vunpack.c.l.b16 %v1148
      %v1228 = vunpack.c.h.b16 %v1148
      %v1229 = vunpack.c.l.b16 %v1149
      %v1230 = vunpack.c.l.b16 %v1150
      %v1231 = vunpack.c.h.b16 %v1150
      %v1232 = vunpack.c.l.b16 %v1151
      %v1233 = vunpack.c.l.b16 %v1152
      %v1234 = vunpack.c.h.b16 %v1152
      %v1235 = vunpack.c.l.b16 %v1153
      %v1236 = vunpack.c.l.b16 %v1154
      %v1237 = vunpack.c.h.b16 %v1154
      %v1238 = vunpack.c.l.b16 %v1155
      %v1239 = vunpack.c.l.b16 %v1156
      %v1240 = vunpack.c.h.b16 %v1156
      %v1241 = vunpack.c.l.b16 %v1157
      %v1242 = vunpack.c.l.b16 %v1158
      %v1243 = vunpack.c.h.b16 %v1158
      %v1244 = vunpack.c.l.b16 %v1159
      %v1245 = vunpack.c.l.b16 %v1160
      %v1246 = vunpack.c.h.b16 %v1160
      %v1247 = vunpack.c.l.b16 %v1161
      %v1248 = vunpack.c.l.b16 %v1162
      %v1249 = vunpack.c.h.b16 %v1162
      %v1250 = vunpack.c.l.b16 %v1163
      %v1251 = vunpack.c.l.b16 %v1164
      %v1252 = vunpack.c.h.b16 %v1164
      %v1253 = vunpack.c.l.b16 %v1165
      %v1254 = vunpack.c.l.b16 %v1166
      %v1255 = vunpack.c.h.b16 %v1166
      %v1256 = vunpack.c.l.b16 %v1167
      %v1257 = vunpack.c.l.b16 %v1168
      %v1258 = vunpack.c.h.b16 %v1168
      %v1259 = vunpack.c.l.b16 %v1169
      %v1260 = vunpack.c.l.b16 %v1170
      %v1261 = vunpack.c.h.b16 %v1170
      %v1262 = vunpack.c.l.b16 %v1171
      %v1263 = vunpack.c.l.b16 %v1172
      %v1264 = vunpack.c.h.b16 %v1172
      %v1265 = vunpack.c.l.b16 %v1173
      %v1266 = vunpack.c.l.b16 %v1174
      %v1267 = vunpack.c.h.b16 %v1174
      %v1268 = vunpack.c.l.b16 %v1175
      %v1269 = vunpack.c.l.b16 %v1176
      %v1270 = vunpack.c.h.b16 %v1176
      %v1271 = vunpack.c.l.b16 %v1177
      %v1272 = vunpack.c.l.b16 %v1178
      %v1273 = vunpack.c.h.b16 %v1178
      %v1274 = vunpack.c.l.b16 %v1179
      %v1275 = vunpack.c.l.b16 %v1180
      %v1276 = vunpack.c.h.b16 %v1180
      %v1277 = vunpack.c.l.b16 %v1181
      %v1278 = vpack.c.b16 %v1227, %v1224
      %v1279 = vpack.c.b16 %v1228, %v1225
      %v1280 = vpack.c.b16 %v1229, %v1226
      %v1281 = vpack.c.b16 %v1233, %v1230
      %v1282 = vpack.c.b16 %v1234, %v1231
      %v1283 = vpack.c.b16 %v1235, %v1232
      %v1284 = vpack.c.b16 %v1239, %v1236
      %v1285 = vpack.c.b16 %v1240, %v1237
      %v1286 = vpack.c.b16 %v1241, %v1238
      %v1287 = vpack.c.b16 %v1245, %v1242
      %v1288 = vpack.c.b16 %v1246, %v1243
      %v1289 = vpack.c.b16 %v1247, %v1244
      %v1290 = vpack.c.b16 %v1251, %v1248
      %v1291 = vpack.c.b16 %v1252, %v1249
      %v1292 = vpack.c.b16 %v1253, %v1250
      %v1293 = vpack.c.b16 %v1257, %v1254
      %v1294 = vpack.c.b16 %v1258, %v1255
      %v1295 = vpack.c.b16 %v1259, %v1256
      %v1296 = vpack.c.b16 %v1263, %v1260
      %v1297 = vpack.c.b16 %v1264, %v1261
      %v1298 = vpack.c.b16 %v1265, %v1262
      %v1299 = vpack.c.b16 %v1269, %v1266
      %v1300 = vpack.c.b16 %v1270, %v1267
      %v1301 = vpack.c.b16 %v1271, %v1268
      %v1302 = vpack.c.b16 %v1275, %v1272
      %v1303 = vpack.c.b16 %v1276, %v1273
      %v1304 = vpack.c.b16 %v1277, %v1274
      %v1333 = vsel %vm751, %v1186, 0
      %1335 = vmatprep.subr.bf16.mxu0 %v1300
      %1336 = vmatpush1.bf16.msra.mxu0 %v1299
      %1337 = vmatprep.subr.bf16.mxu0 %v1297
      %1338 = vmatpush1.bf16.msra.mxu0 %v1296
      %1339 = vmatprep.subr.bf16.mxu0 %v1294
      %1340 = vmatpush1.bf16.msra.mxu0 %v1293
      %1341 = vmatprep.subr.bf16.mxu0 %v1291
      %1342 = vmatpush1.bf16.msra.mxu0 %v1290
      %1343 = vmatprep.subr.bf16.mxu0 %v1288
      %1344 = vmatpush1.bf16.msra.mxu0 %v1287
      %1345 = vmatprep.subr.bf16.mxu0 %v1285
      %1346 = vmatpush1.bf16.msra.mxu0 %v1284
      %1347 = vmatprep.subr.bf16.mxu0 %v1282
      %1348 = vmatpush1.bf16.msra.mxu0 %v1281
      %1349 = vmatprep.subr.bf16.mxu0 %v1279
      %1350 = vmatpush1.bf16.msra.mxu0 %v1278
      %1351 = vmatprep.subr.bf16.mxu0 0
      %1352 = vmatpush2.bf16.msra.mxu0 0
      %1353 = vmatprep.subr.bf16.mxu0 0
      %1354 = vmatpush2.bf16.msra.mxu0 0
      %1355 = vmatprep.subr.bf16.mxu0 0
      %1356 = vmatpush2.bf16.msra.mxu0 0
      %1357 = vmatprep.subr.bf16.mxu0 0
      %1358 = vmatpush2.bf16.msra.mxu0 0
      %1359 = vmatprep.subr.bf16.mxu0 0
      %1360 = vmatpush2.bf16.msra.mxu0 0
      %1361 = vmatprep.subr.bf16.mxu0 0
      %1362 = vmatpush2.bf16.msra.mxu0 0
      %1363 = vmatprep.subr.bf16.mxu0 0
      %1364 = vmatpush2.bf16.msra.mxu0 0
      %1365 = vmatprep.subr.bf16.mxu0 %v1303
      %1366 = vmatpush2.bf16.msra.mxu0 %v1302
      %1367 = vmatprep.mubr.bf16.mxu0 %v1333
      %1368 = vmatmul.mubr.bf16.gmra.mxu0 %v1185
      %v1369 = vpop.f32.mrf.mxu0
      %v1370 = vadd.f32 0.0, %v1369
      %v1371 = vpop.f32.mrf.mxu0
      %v1372 = vadd.f32 0.0, %v1371
      %v1373 = vpop.f32.mrf.mxu0
      %v1374 = vpop.f32.mrf.mxu0
      %1375 = vdwg.mxu0
      %1376 = vmatprep.subr.bf16.mxu0 0
      %1377 = vmatpush1.bf16.msra.mxu0 %v1301
      %1378 = vmatprep.subr.bf16.mxu0 0
      %1379 = vmatpush1.bf16.msra.mxu0 %v1298
      %1380 = vmatprep.subr.bf16.mxu0 0
      %1381 = vmatpush1.bf16.msra.mxu0 %v1295
      %1382 = vmatprep.subr.bf16.mxu0 0
      %1383 = vmatpush1.bf16.msra.mxu0 %v1292
      %1384 = vmatprep.subr.bf16.mxu0 0
      %1385 = vmatpush1.bf16.msra.mxu0 %v1289
      %1386 = vmatprep.subr.bf16.mxu0 0
      %1387 = vmatpush1.bf16.msra.mxu0 %v1286
      %1388 = vmatprep.subr.bf16.mxu0 0
      %1389 = vmatpush1.bf16.msra.mxu0 %v1283
      %1390 = vmatprep.subr.bf16.mxu0 0
      %1391 = vmatpush1.bf16.msra.mxu0 %v1280
      %1392 = vmatprep.subr.bf16.mxu0 0
      %1393 = vmatpush2.bf16.msra.mxu0 0
      %1394 = vmatprep.subr.bf16.mxu0 0
      %1395 = vmatpush2.bf16.msra.mxu0 0
      %1396 = vmatprep.subr.bf16.mxu0 0
      %1397 = vmatpush2.bf16.msra.mxu0 0
      %1398 = vmatprep.subr.bf16.mxu0 0
      %1399 = vmatpush2.bf16.msra.mxu0 0
      %1400 = vmatprep.subr.bf16.mxu0 0
      %1401 = vmatpush2.bf16.msra.mxu0 0
      %1402 = vmatprep.subr.bf16.mxu0 0
      %1403 = vmatpush2.bf16.msra.mxu0 0
      %1404 = vmatprep.subr.bf16.mxu0 0
      %1405 = vmatpush2.bf16.msra.mxu0 0
      %1406 = vmatprep.subr.bf16.mxu0 0
      %1407 = vmatpush2.bf16.msra.mxu0 %v1304
      %1408 = vmatprep.mubr.bf16.mxu0 %v1333
      %1409 = vmatmul.mubr.bf16.gmra.mxu0 %v1185
      %v1410 = vpop.f32.mrf.mxu0
      %v1411 = vadd.f32 0.0, %v1410
      %v1412 = vpop.f32.mrf.mxu0
      %v1413 = vpop.f32.mrf.mxu0
      %v1414 = vpop.f32.mrf.mxu0
      %1415 = vdwg.mxu0
      %v1416 = vadd.f32 %v803, %v1370
      %v1417 = vadd.f32 %v805, %v1372
      %v1418 = vadd.f32 %v852, %v1411
      %v1419 = vtanh.pop %v1416
      %v1420 = vtanh.pop %v1417
      %v1421 = vtanh.pop %v1418
      %v1422 = vsub.f32 1.0, %v870
      %v1423 = vsub.f32 1.0, %v872
      %v1424 = vsub.f32 1.0, %v874
      %v1425 = vmul.f32 %v893, %v1422
      %v1426 = vmul.f32 %v894, %v1423
      %v1427 = vmul.f32 %v895, %v1424
      %v1428 = vmul.f32 %v1419, %v870
      %v1429 = vmul.f32 %v1420, %v872
      %v1430 = vmul.f32 %v1421, %v874
      %v1431 = vadd.f32 %v1425, %v1428
      %v1432 = vadd.f32 %v1426, %v1429
      %v1433 = vadd.f32 %v1427, %v1430
      %1434 = vst [vmem:[%s244] sm:$0xff] %v1431
      %1435 = vst [vmem:[%s244 + $0x8] sm:$0xff] %v1432
      %1436 = vst [vmem:[%s244 + $0x10] sm:$0xff] %v1433
      %p1437 = scmp.lt.s32.totalorder %s16, 1
      %s1438 = scalar_select %p1437, %s16, 1
      %s1439 = smul.addr %s1438, 3
      %s1440 = smul.addr %s1439, 8
      %s1441 = scalar_lea.vmem %s5, %s1440
      // Predicated region
      $region41: #{conv_gru_cell.1} parent=39 // pred_check
        %p1442 = pneg %p149
      $region42: #{conv_gru_cell.1} parent=39 // pred_check_branch
        %1444 = sbr.rel (%p1442) target = $region44
      $region43: #{conv_gru_cell.1} parent=39 // pred_region
        _
      $region44: #{conv_gru_cell.1} parent=39 // pred_fallthru
        _
    $region40: #{conv_gru_cell.1} parent=5 // pred_fallthru
      _
    %p1445 = scmp.le.s32.totalorder 2, %s11
    // Predicated region
    $region45: #{conv_gru_cell.1} parent=5 // pred_check
      %p1446 = pneg %p1445
    $region46: #{conv_gru_cell.1} parent=5 // pred_check_branch
      %1448 = sbr.rel (%p1446) target = $region48
    $region47: #{conv_gru_cell.1} parent=5 // pred_region
      %s1449 = ssub.s32 %s11, 2
      // Predicated region
      $region49: #{conv_gru_cell.1} parent=47 // pred_check
        %p1450 = pneg %p155
      $region50: #{conv_gru_cell.1} parent=47 // pred_check_branch
        %1452 = sbr.rel (%p1450) target = $region52
      $region51: #{conv_gru_cell.1} parent=47 // pred_region
        %p1453 = scmp.lt.s32.totalorder %s17, 1
        %s1454 = scalar_select %p1453, %s17, 1
        %s1455 = smul.addr %s1454, 3
        %s1456 = smul.addr %s1455, 8
        %s1457 = scalar_lea.vmem %s5, %s1456
      $region52: #{conv_gru_cell.1} parent=47 // pred_fallthru
        _
    $region48: #{conv_gru_cell.1} parent=5 // pred_fallthru
      _
  $region6: #{conv_gru_cell.1} parent=0 // loop_footer
    %s15 = sadd.s32 1, %s11
  $region7: #{conv_gru_cell.1} parent=0 // loop_footer_branch
    %10 = sbr.rel target = $region3
  $region8: #{conv_gru_cell.1} parent=0 // loop_exit
    _

</llo_original>
